<compile_context>
chip_gen: v6e
topology: v6e:2x2x1
jax: 0.10.0
libtpu: 0.0.40
codegen_flags: <defaults>
</compile_context>

<pallas_src>
import jax
import jax.numpy as jnp
from jax import lax
from jax.experimental import pallas as pl
from jax.experimental.pallas import tpu as pltpu

B = 8          # batch
ID_EMB = 16    # item-id embedding dim (emb_dim arg of DALLE.__init__)
SIDE = 16      # output_emb_size: one 'spr' side feature with emb_dim=16
CB_K = 32      # codebook_size
CB_D = 8       # codebook_dim == attention emb_dim (self.emb_dim = 8)
HEADS = 4
HEAD_D = CB_D // HEADS   # = 2
H1 = 16        # encoder hidden width
XW = 64        # packed per-call input width: [item 0:16 | side 16:32 | noise 32:48 | cnt 48 | pad]


def dalle_kernel(x_ref, w_ref, c_ref, sel_ref, cbTt_ref, kblk_ref, vaug_ref,
                 pred_ref, loss_ref):
    f32 = jnp.float32
    bf16 = jnp.bfloat16

    x = x_ref[...]                               # (8, 64) packed per-call activations
    item = x[:, 0:ID_EMB]                        # item_id_emb (reused for recon loss)
    x_cat = x[:, 0:ID_EMB + SIDE]                # [item | side] for the fused encoders
    noise = x[:, 32:48]                          # [nz | nzp] reparam noise

    # f32 bias/constant slab (one row per vector)
    enc_b1 = c_ref[0:1, 0:4 * H1]                # (1, 64)
    enc_b2 = c_ref[1:2, 0:4 * CB_D]              # (1, 32)
    dec_b1 = c_ref[2:3, 0:12]
    dec_b2 = c_ref[3:4, 0:ID_EMB]
    bq     = c_ref[4:5, 0:CB_D]
    fc_b   = c_ref[5:6, 0:ID_EMB]
    cb_sq  = c_ref[6:7, 0:CB_K]                  # ||cb_k||^2 (precomputed)

    # ---- fused VAE encoders: 2 block-diagonal matmuls replace 8 tiny ones ----
    h = jnp.dot(x_cat.astype(bf16), w_ref[0:32, 0:64],
                preferred_element_type=f32) + enc_b1                    # (8, 64)
    h = jnp.maximum(h, 0.0)
    enc = jnp.dot(h.astype(bf16), w_ref[32:96, 0:32],
                  preferred_element_type=f32) + enc_b2                  # (8, 32)
    means = enc[:, 0:2 * CB_D]                                          # [mean | mean_p]
    stds = jnp.exp(0.5 * enc[:, 2 * CB_D:4 * CB_D])                     # [std | std_p] (one exp)
    mean, mean_p = enc[:, 0:CB_D], enc[:, CB_D:2 * CB_D]
    std, std_p = stds[:, 0:CB_D], stds[:, CB_D:2 * CB_D]

    # ---- wasserstein regularizer (sqrt(exp(lv)) == exp(0.5 lv) == std, reused) ----
    dm = mean - mean_p
    dsd = std - std_p
    reg = jnp.sum(dm * dm + dsd * dsd, axis=(0, 1), keepdims=True)      # (1, 1)

    # ---- reparameterization ----
    zz = means + stds * noise                                           # (8, 16) = [z | z_p]
    z, z_p = zz[:, 0:CB_D], zz[:, CB_D:2 * CB_D]

    # ---- vector quantizer on z (squared cdist via norm expansion, sqrt dropped) ----
    outer = z[:, :, None] * z[:, None, :]                               # (8, 8, 8)
    a = jnp.sqrt(outer).reshape(B * CB_D, CB_D)                         # NaN where product<0 (torch-faithful)
    a_sq = jnp.sum(a * a, axis=-1, keepdims=True)                       # (64, 1), NaN rows propagate
    cbT_tiled = cbTt_ref[...]                                           # (64, 32) precomputed tiled cb^T
    cbT = cbT_tiled[0:CB_D, :]                                          # (8, 32)
    cross = jnp.dot(a, cbT, preferred_element_type=f32)                 # f32: decides the argmin
    dist_sq = a_sq - 2.0 * cross + cb_sq                                # (64, 32)
    # torch.argmin treats NaN as a minimum (first NaN index wins) -> emulate via -inf
    dist_c = jnp.where(jnp.isnan(dist_sq), -jnp.inf, dist_sq)
    min_d = jnp.min(dist_c, axis=-1, keepdims=True)
    iota_k = lax.broadcasted_iota(jnp.int32, (B * CB_D, CB_K), 1)
    idx = jnp.min(jnp.where(dist_c == min_d, iota_k, CB_K), axis=-1, keepdims=True)
    one_hot = (iota_k == idx).astype(f32)                               # (64, 32)

    # z_q[b,d] = cb[idx[b,d], d] -> elementwise select against the tiled cb^T
    z_q = jnp.sum(one_hot * cbT_tiled, axis=-1).reshape(B, CB_D)        # (8, 8)

    dq = z_q - z
    vq = (jnp.sum(dq * dq, axis=(0, 1), keepdims=True) / (B * CB_D)) * (1.0 + 0.25)

    # perplexity: avg_probs = mean_b one_hot (per codebook-dim), via precomputed selector
    avg_probs = jnp.dot(sel_ref[8:16, :], one_hot, preferred_element_type=f32)   # (8, 32)
    ent = jnp.sum(avg_probs * jnp.log(avg_probs + 1e-10), axis=(0, 1), keepdims=True)
    ppl = jnp.exp(-ent)

    # ---- decoder Linear(9,12)+ReLU+Linear(12,16); recon loss vs item_id_emb ----
    # dec_in = [z_q | cnt | 0-pad] (8,16) against a 16-row aligned weight slice (rows 9:16 are 0)
    dec_in = jnp.concatenate([z_q, x[:, 48:56]], axis=1)                # (8, 16)
    hd = jnp.maximum(jnp.dot(dec_in.astype(bf16), w_ref[96:112, 0:12],
                             preferred_element_type=f32) + dec_b1, 0.0)
    decode_out = jnp.dot(hd.astype(bf16), w_ref[112:124, 0:16],
                         preferred_element_type=f32) + dec_b2           # (8, 16)
    derr = decode_out - item
    recon = jnp.sum(derr * derr, axis=(0, 1), keepdims=True) / B

    # packed scalar losses -> one (1,4) store: [reg, vq, ppl, recon]
    loss_ref[...] = jnp.concatenate([reg, vq, ppl, recon], axis=1)

    # ---- fused 4-head cross attention: query = z_p outer seq (8), key/value = codebook (32) ----
    zp_outer = (z_p[:, :, None] * z_p[:, None, :]).reshape(B * CB_D, CB_D)       # (64, 8)
    q = jnp.dot(zp_outer.astype(bf16), w_ref[128:136, 0:CB_D],
                preferred_element_type=f32) + bq                                 # (64, 8)
    # K_blk precomputed host-side (block-diagonal, scale folded in) -> one lane-dense matmul
    scores = jnp.dot(q, kblk_ref[...], preferred_element_type=f32)               # (64, 128)
    # global row-max; softmax stays per-head because denominators are per-head sums
    m = jnp.max(scores, axis=-1, keepdims=True)
    e = jnp.exp(scores - m)                                                      # one batched EUP pass
    # [V_blk | seg8]: unnormalized output AND per-head sums in a single matmul
    res = jnp.dot(e, vaug_ref[...], preferred_element_type=f32)                  # (64, 16)
    inv = pl.reciprocal(res[:, CB_D:2 * CB_D], approx=True)                      # per-head 1/sum, expanded
    out = res[:, 0:CB_D] * inv                                                   # (64, 8)

    # pred = attention output summed over the 8 query positions, per batch, then fc_out
    pred_sum = jnp.dot(sel_ref[0:8, :], out, preferred_element_type=f32)         # (8, 8)
    pred_ref[...] = jnp.dot(pred_sum.astype(bf16), w_ref[144:152, 0:ID_EMB],
                            preferred_element_type=f32) + fc_b                   # (8, 16)


@jax.jit
def dalle_pallas(item_id_emb, sideinfo_emb, count, noise, ops):
    pad = jnp.zeros((B, XW - (ID_EMB + SIDE + 2 * CB_D + 1)), jnp.float32)
    x_in = jnp.concatenate([item_id_emb, sideinfo_emb, noise, count, pad], axis=1)   # (8, 64)

    inputs = [x_in, ops['w_all'], ops['const'], ops['selmat'],
              ops['cbT_tiled'], ops['k_blk'], ops['v_aug']]

    def full_spec(shape):
        nd = len(shape)
        return pl.BlockSpec(shape, lambda i, nd=nd: (0,) * nd)

    out_shape = (jax.ShapeDtypeStruct((B, ID_EMB), jnp.float32),   # warm_id_emb (pred)
                 jax.ShapeDtypeStruct((1, 4), jnp.float32))        # [reg, vq, ppl, recon]

    # TODO(synk): stack multiple micro-batches on a leading "parallel" grid axis for megacore.
    pred, losses = pl.pallas_call(
        dalle_kernel,
        out_shape=out_shape,
        grid=(1,),
        in_specs=[full_spec(tuple(v.shape)) for v in inputs],
        out_specs=tuple(full_spec(s.shape) for s in out_shape),
        compiler_params=pltpu.CompilerParams(dimension_semantics=("arbitrary",)),
    )(*inputs)
    return pred, losses[0, 0], losses[0, 1], losses[0, 2], losses[0, 3]


def init_params(key):
    ks = jax.random.split(key, 34)
    n = lambda k, shape, s=0.1: jax.random.normal(k, shape, jnp.float32) * s
    p = {}
    p['codebook'] = jax.random.normal(ks[0], (CB_K, CB_D), jnp.float32)   # nn.Parameter(torch.randn(32, 8))
    # encoders (weights stored as (in, out) == torch W.T)
    p['mean_w1'] = n(ks[1], (ID_EMB, H1));  p['mean_b1'] = n(ks[2], (H1,))
    p['mean_w2'] = n(ks[3], (H1, CB_D));    p['mean_b2'] = n(ks[4], (CB_D,))
    p['logv_w1'] = n(ks[5], (ID_EMB, H1));  p['logv_b1'] = n(ks[6], (H1,))
    p['logv_w2'] = n(ks[7], (H1, CB_D));    p['logv_b2'] = n(ks[8], (CB_D,))
    p['meanp_w1'] = n(ks[9], (SIDE, H1));   p['meanp_b1'] = n(ks[10], (H1,))
    p['meanp_w2'] = n(ks[11], (H1, CB_D));  p['meanp_b2'] = n(ks[12], (CB_D,))
    p['logvp_w1'] = n(ks[13], (SIDE, H1));  p['logvp_b1'] = n(ks[14], (H1,))
    p['logvp_w2'] = n(ks[15], (H1, CB_D));  p['logvp_b2'] = n(ks[16], (CB_D,))
    # decoder Linear(9,12) + ReLU + Linear(12,16)
    p['dec_w1'] = n(ks[17], (CB_D + 1, 12)); p['dec_b1'] = n(ks[18], (12,))
    p['dec_w2'] = n(ks[19], (12, ID_EMB));   p['dec_b2'] = n(ks[20], (ID_EMB,))
    # attention projections
    p['q_w'] = n(ks[21], (CB_D, CB_D)); p['q_b'] = n(ks[22], (CB_D,))
    p['k_w'] = n(ks[23], (CB_D, CB_D)); p['k_b'] = n(ks[24], (CB_D,))
    p['v_w'] = n(ks[25], (CB_D, CB_D)); p['v_b'] = n(ks[26], (CB_D,))
    p['fc_w'] = n(ks[27], (CB_D, ID_EMB)); p['fc_b'] = n(ks[28], (ID_EMB,))
    # embedding tables + synthesized backbone head
    p['item_emb_table'] = n(ks[29], (64, ID_EMB))   # origin_item_emb
    p['side_emb_table'] = n(ks[30], (64, SIDE))     # one 'spr' side feature embedding
    p['backbone_w'] = n(ks[31], (ID_EMB + SIDE + 1, 1))
    p['backbone_b'] = n(ks[32], (1,))
    return p


def prepare_ops(p):
    """Host-side fusion: pack all parameters & constants into a few tile-aligned slabs."""
    f32, bf16 = jnp.float32, jnp.bfloat16
    ops = {}
    cb = p['codebook'].astype(f32)                      # (32, 8)
    cbT = cb.T                                          # (8, 32)

    # fused encoder layer 1: rows 0:16 = item features, rows 16:32 = side features
    W1 = jnp.zeros((2 * ID_EMB, 4 * H1), f32)
    W1 = W1.at[0:ID_EMB, 0:H1].set(p['mean_w1'])
    W1 = W1.at[0:ID_EMB, H1:2 * H1].set(p['logv_w1'])
    W1 = W1.at[ID_EMB:, 2 * H1:3 * H1].set(p['meanp_w1'])
    W1 = W1.at[ID_EMB:, 3 * H1:4 * H1].set(p['logvp_w1'])
    b1 = jnp.concatenate([p['mean_b1'], p['logv_b1'], p['meanp_b1'], p['logvp_b1']])
    # fused encoder layer 2: output cols [mean | mean_p | log_v | log_v_p]
    W2 = jnp.zeros((4 * H1, 4 * CB_D), f32)
    W2 = W2.at[0:H1, 0:CB_D].set(p['mean_w2'])
    W2 = W2.at[H1:2 * H1, 2 * CB_D:3 * CB_D].set(p['logv_w2'])
    W2 = W2.at[2 * H1:3 * H1, CB_D:2 * CB_D].set(p['meanp_w2'])
    W2 = W2.at[3 * H1:4 * H1, 3 * CB_D:4 * CB_D].set(p['logvp_w2'])
    b2 = jnp.concatenate([p['mean_b2'], p['meanp_b2'], p['logv_b2'], p['logvp_b2']])

    # --- one bf16 weight slab; row offsets are multiples of 16 (bf16 sublane packing) ---
    W = jnp.zeros((160, 64), f32)
    W = W.at[0:32, 0:64].set(W1)                     # fused encoder L1
    W = W.at[32:96, 0:32].set(W2)                    # fused encoder L2
    W = W.at[96:105, 0:12].set(p['dec_w1'])          # decoder L1 (rows 105:112 stay 0)
    W = W.at[112:124, 0:16].set(p['dec_w2'])         # decoder L2
    W = W.at[128:136, 0:CB_D].set(p['q_w'])          # query projection
    W = W.at[144:152, 0:ID_EMB].set(p['fc_w'])       # fc_out
    ops['w_all'] = W.astype(bf16)

    # --- f32 bias/constant slab: one row per vector (all slices lane-offset 0) ---
    C = jnp.zeros((8, 64), f32)
    C = C.at[0, 0:4 * H1].set(b1)
    C = C.at[1, 0:4 * CB_D].set(b2)
    C = C.at[2, 0:12].set(p['dec_b1'])
    C = C.at[3, 0:ID_EMB].set(p['dec_b2'])
    C = C.at[4, 0:CB_D].set(p['q_b'])
    C = C.at[5, 0:ID_EMB].set(p['fc_b'])
    C = C.at[6, 0:CB_K].set(jnp.sum(cb * cb, axis=1))    # ||cb_k||^2
    ops['const'] = C

    # --- selection matrices: [rowsum (8,64); pplsel (8,64)] ---
    r_idx = jnp.arange(B * CB_D)
    rowsum = (jnp.arange(B)[:, None] == r_idx[None, :] // CB_D).astype(f32)      # (8, 64)
    pplsel = (jnp.arange(CB_D)[:, None] == r_idx[None, :] % CB_D).astype(f32) / B
    ops['selmat'] = jnp.concatenate([rowsum, pplsel], axis=0)                    # (16, 64)

    # --- codebook^T tiled (rows 0:8 give plain cb^T) for the VQ cross term & z_q gather ---
    ops['cbT_tiled'] = jnp.tile(cbT, (B, 1))                                     # (64, 32)

    # --- attention K / V: depend only on the constant codebook -> fully precomputed ---
    K = cb @ p['k_w'] + p['k_b'][None, :]                                        # (32, 8)
    V = cb @ p['v_w'] + p['v_b'][None, :]                                        # (32, 8)
    d_idx = jnp.arange(CB_D)
    c_idx = jnp.arange(HEADS * CB_K)
    hmask = (d_idx[:, None] // HEAD_D == c_idx[None, :] // CB_K).astype(f32)     # (8, 128)
    scale = 1.0 / (HEAD_D ** 0.5)
    ops['k_blk'] = jnp.tile(K.T, (1, HEADS)) * hmask * scale                     # (8, 128)
    V_blk = jnp.tile(V, (HEADS, 1)) * hmask.T                                    # (128, 8)
    seg8 = hmask.T                                                               # (128, 8)
    ops['v_aug'] = jnp.concatenate([V_blk, seg8], axis=1)                        # (128, 16)
    return ops


def forward(params, ops, x_dict, noise_key):
    # glue: embedding lookups + noise generation (plain JAX), hot path in the Pallas kernel
    item_id_emb = params['item_emb_table'][x_dict['item_id']]      # (B, 16)
    sideinfo_emb = params['side_emb_table'][x_dict['side_feat']]   # (B, 16)
    count = x_dict['count']                                        # (B, 1)
    k1, k2 = jax.random.split(noise_key)
    noise = jnp.concatenate([jax.random.normal(k1, (B, CB_D), jnp.float32),
                             jax.random.normal(k2, (B, CB_D), jnp.float32)], axis=1)   # (B, 16)

    warm_id_emb, reg_term, vq_loss, perplexity, recon_loss = dalle_pallas(
        item_id_emb, sideinfo_emb, count, noise, ops)

    # TODO(synk): the external backbone `model.forward_with_item_id_emb` is not part of this
    # module; synthesized here as a linear + sigmoid CTR head over [warm_id_emb, side, count].
    feat = jnp.concatenate([warm_id_emb, sideinfo_emb, count], axis=1)
    target = jax.nn.sigmoid(feat @ params['backbone_w'] + params['backbone_b'])

    return recon_loss, reg_term, target, vq_loss, perplexity


if __name__ == "__main__":
    key = jax.random.PRNGKey(0)
    kp, kd, kn = jax.random.split(key, 3)
    params = init_params(kp)
    ops = prepare_ops(params)
    kid, kside, kcnt = jax.random.split(kd, 3)
    x_dict = {
        'item_id': jax.random.randint(kid, (B,), 0, 64),
        'side_feat': jax.random.randint(kside, (B,), 0, 64),
        'count': jax.random.uniform(kcnt, (B, 1), jnp.float32, 0.0, 10.0),
    }
    recon_loss, reg_term, target, vq_loss, perplexity = forward(params, ops, x_dict, kn)
    jax.block_until_ready((recon_loss, reg_term, target, vq_loss, perplexity))
    print("KERNEL_OK")
</pallas_src>

<mosaic_0001>
module attributes {stable_mosaic.version = 11 : i64} {
  func.func @dalle_kernel(%arg0: i32, %arg1: memref<8x64xf32, #tpu.memory_space<vmem>>, %arg2: memref<160x64xbf16, #tpu.memory_space<vmem>>, %arg3: memref<8x64xf32, #tpu.memory_space<vmem>>, %arg4: memref<16x64xf32, #tpu.memory_space<vmem>>, %arg5: memref<64x32xf32, #tpu.memory_space<vmem>>, %arg6: memref<8x128xf32, #tpu.memory_space<vmem>>, %arg7: memref<128x16xf32, #tpu.memory_space<vmem>>, %arg8: memref<8x16xf32, #tpu.memory_space<vmem>>, %arg9: memref<1x4xf32, #tpu.memory_space<vmem>>) attributes {dimension_semantics = [#tpu.dimension_semantics<arbitrary>], iteration_bounds = array<i64: 1>, scalar_prefetch = 0 : i64, scratch_operands = 0 : i64, tpu.core_type = #tpu.core_type<tc>, window_params = [{pipeline_mode = #tpu.pipeline_mode<synchronous>, transform_indices = @transform_0, window_bounds = array<i64: 8, 64>}, {pipeline_mode = #tpu.pipeline_mode<synchronous>, transform_indices = @transform_1, window_bounds = array<i64: 160, 64>}, {pipeline_mode = #tpu.pipeline_mode<synchronous>, transform_indices = @transform_2, window_bounds = array<i64: 8, 64>}, {pipeline_mode = #tpu.pipeline_mode<synchronous>, transform_indices = @transform_3, window_bounds = array<i64: 16, 64>}, {pipeline_mode = #tpu.pipeline_mode<synchronous>, transform_indices = @transform_4, window_bounds = array<i64: 64, 32>}, {pipeline_mode = #tpu.pipeline_mode<synchronous>, transform_indices = @transform_5, window_bounds = array<i64: 8, 128>}, {pipeline_mode = #tpu.pipeline_mode<synchronous>, transform_indices = @transform_6, window_bounds = array<i64: 128, 16>}, {pipeline_mode = #tpu.pipeline_mode<synchronous>, transform_indices = @transform_7, window_bounds = array<i64: 8, 16>}, {pipeline_mode = #tpu.pipeline_mode<synchronous>, transform_indices = @transform_8, window_bounds = array<i64: 1, 4>}]} {
    %c0 = arith.constant 0 : index
    %c0_0 = arith.constant 0 : index
    %0 = vector.load %arg1[%c0, %c0_0] : memref<8x64xf32, #tpu.memory_space<vmem>>, vector<8x64xf32>
    %1 = vector.extract_strided_slice %0 {offsets = [0, 0], sizes = [8, 16], strides = [1, 1]} : vector<8x64xf32> to vector<8x16xf32>
    %2 = vector.extract_strided_slice %0 {offsets = [0, 0], sizes = [8, 32], strides = [1, 1]} : vector<8x64xf32> to vector<8x32xf32>
    %3 = vector.extract_strided_slice %0 {offsets = [0, 32], sizes = [8, 16], strides = [1, 1]} : vector<8x64xf32> to vector<8x16xf32>
    %c0_1 = arith.constant 0 : index
    %c0_2 = arith.constant 0 : index
    %4 = vector.load %arg3[%c0_1, %c0_2] : memref<8x64xf32, #tpu.memory_space<vmem>>, vector<1x64xf32>
    %c1 = arith.constant 1 : index
    %c0_3 = arith.constant 0 : index
    %5 = vector.load %arg3[%c1, %c0_3] : memref<8x64xf32, #tpu.memory_space<vmem>>, vector<1x32xf32>
    %c2 = arith.constant 2 : index
    %c0_4 = arith.constant 0 : index
    %6 = vector.load %arg3[%c2, %c0_4] : memref<8x64xf32, #tpu.memory_space<vmem>>, vector<1x12xf32>
    %c3 = arith.constant 3 : index
    %c0_5 = arith.constant 0 : index
    %7 = vector.load %arg3[%c3, %c0_5] : memref<8x64xf32, #tpu.memory_space<vmem>>, vector<1x16xf32>
    %c4 = arith.constant 4 : index
    %c0_6 = arith.constant 0 : index
    %8 = vector.load %arg3[%c4, %c0_6] : memref<8x64xf32, #tpu.memory_space<vmem>>, vector<1x8xf32>
    %c5 = arith.constant 5 : index
    %c0_7 = arith.constant 0 : index
    %9 = vector.load %arg3[%c5, %c0_7] : memref<8x64xf32, #tpu.memory_space<vmem>>, vector<1x16xf32>
    %c6 = arith.constant 6 : index
    %c0_8 = arith.constant 0 : index
    %10 = vector.load %arg3[%c6, %c0_8] : memref<8x64xf32, #tpu.memory_space<vmem>>, vector<1x32xf32>
    %11 = arith.truncf %2 : vector<8x32xf32> to vector<8x32xbf16>
    %c0_9 = arith.constant 0 : index
    %c0_10 = arith.constant 0 : index
    %12 = vector.load %arg2[%c0_9, %c0_10] : memref<160x64xbf16, #tpu.memory_space<vmem>>, vector<32x64xbf16>
    %cst = arith.constant dense<0.000000e+00> : vector<8x64xf32>
    %13 = tpu.matmul %11, %12, %cst {dimension_numbers = #tpu.dot_dimension_numbers<[1], [0], [0], [1], [0, 0, 1, 1], [], []>} : vector<8x32xbf16>, vector<32x64xbf16>, vector<8x64xf32> -> vector<8x64xf32>
    %14 = vector.broadcast %4 : vector<1x64xf32> to vector<8x64xf32>
    %15 = arith.addf %13, %14 : vector<8x64xf32>
    %cst_11 = arith.constant 0.000000e+00 : f32
    %16 = vector.broadcast %cst_11 : f32 to vector<8x64xf32>
    %17 = arith.maximumf %15, %16 : vector<8x64xf32>
    %18 = arith.truncf %17 : vector<8x64xf32> to vector<8x64xbf16>
    %c32 = arith.constant 32 : index
    %c0_12 = arith.constant 0 : index
    %19 = vector.load %arg2[%c32, %c0_12] : memref<160x64xbf16, #tpu.memory_space<vmem>>, vector<64x32xbf16>
    %cst_13 = arith.constant dense<0.000000e+00> : vector<8x32xf32>
    %20 = tpu.matmul %18, %19, %cst_13 {dimension_numbers = #tpu.dot_dimension_numbers<[1], [0], [0], [1], [0, 0, 1, 1], [], []>} : vector<8x64xbf16>, vector<64x32xbf16>, vector<8x32xf32> -> vector<8x32xf32>
    %21 = vector.broadcast %5 : vector<1x32xf32> to vector<8x32xf32>
    %22 = arith.addf %20, %21 : vector<8x32xf32>
    %23 = vector.extract_strided_slice %22 {offsets = [0, 0], sizes = [8, 16], strides = [1, 1]} : vector<8x32xf32> to vector<8x16xf32>
    %24 = vector.extract_strided_slice %22 {offsets = [0, 16], sizes = [8, 16], strides = [1, 1]} : vector<8x32xf32> to vector<8x16xf32>
    %cst_14 = arith.constant 5.000000e-01 : f32
    %25 = vector.broadcast %cst_14 : f32 to vector<8x16xf32>
    %26 = arith.mulf %25, %24 : vector<8x16xf32>
    %27 = math.exp %26 : vector<8x16xf32>
    %28 = vector.extract_strided_slice %22 {offsets = [0, 0], sizes = [8, 8], strides = [1, 1]} : vector<8x32xf32> to vector<8x8xf32>
    %29 = vector.extract_strided_slice %22 {offsets = [0, 8], sizes = [8, 8], strides = [1, 1]} : vector<8x32xf32> to vector<8x8xf32>
    %30 = vector.extract_strided_slice %27 {offsets = [0, 0], sizes = [8, 8], strides = [1, 1]} : vector<8x16xf32> to vector<8x8xf32>
    %31 = vector.extract_strided_slice %27 {offsets = [0, 8], sizes = [8, 8], strides = [1, 1]} : vector<8x16xf32> to vector<8x8xf32>
    %32 = arith.subf %28, %29 : vector<8x8xf32>
    %33 = arith.subf %30, %31 : vector<8x8xf32>
    %34 = arith.mulf %32, %32 : vector<8x8xf32>
    %35 = arith.mulf %33, %33 : vector<8x8xf32>
    %36 = arith.addf %34, %35 : vector<8x8xf32>
    %37 = vector.shape_cast %36 : vector<8x8xf32> to vector<1x8x8xf32>
    %cst_15 = arith.constant dense<0.000000e+00> : vector<1xf32>
    %38 = vector.multi_reduction <add>, %37, %cst_15 [1, 2] : vector<1x8x8xf32> to vector<1xf32>
    %39 = vector.shape_cast %38 : vector<1xf32> to vector<1x1x1xf32>
    %40 = vector.extract %39[0, 0, 0] : f32 from vector<1x1x1xf32>
    %41 = vector.broadcast %40 : f32 to vector<1x1xf32>
    %42 = arith.mulf %27, %3 : vector<8x16xf32>
    %43 = arith.addf %23, %42 : vector<8x16xf32>
    %44 = vector.extract_strided_slice %43 {offsets = [0, 0], sizes = [8, 8], strides = [1, 1]} : vector<8x16xf32> to vector<8x8xf32>
    %45 = vector.extract_strided_slice %43 {offsets = [0, 8], sizes = [8, 8], strides = [1, 1]} : vector<8x16xf32> to vector<8x8xf32>
    %46 = vector.shape_cast %44 : vector<8x8xf32> to vector<8x8x1xf32>
    %47 = vector.shape_cast %44 : vector<8x8xf32> to vector<8x1x8xf32>
    %48 = vector.broadcast %46 : vector<8x8x1xf32> to vector<8x8x8xf32>
    %49 = vector.broadcast %47 : vector<8x1x8xf32> to vector<8x8x8xf32>
    %50 = arith.mulf %48, %49 : vector<8x8x8xf32>
    %51 = math.sqrt %50 : vector<8x8x8xf32>
    %52 = vector.shape_cast %51 : vector<8x8x8xf32> to vector<64x8xf32>
    %53 = arith.mulf %52, %52 : vector<64x8xf32>
    %cst_16 = arith.constant dense<0.000000e+00> : vector<64xf32>
    %54 = vector.multi_reduction <add>, %53, %cst_16 [1] : vector<64x8xf32> to vector<64xf32>
    %55 = vector.shape_cast %54 : vector<64xf32> to vector<64x1xf32>
    %c0_17 = arith.constant 0 : index
    %c0_18 = arith.constant 0 : index
    %56 = vector.load %arg5[%c0_17, %c0_18] : memref<64x32xf32, #tpu.memory_space<vmem>>, vector<64x32xf32>
    %57 = vector.extract_strided_slice %56 {offsets = [0, 0], sizes = [8, 32], strides = [1, 1]} : vector<64x32xf32> to vector<8x32xf32>
    %cst_19 = arith.constant dense<0.000000e+00> : vector<64x32xf32>
    %58 = tpu.matmul %52, %57, %cst_19 {dimension_numbers = #tpu.dot_dimension_numbers<[1], [0], [0], [1], [0, 0, 1, 1], [], []>} : vector<64x8xf32>, vector<8x32xf32>, vector<64x32xf32> -> vector<64x32xf32>
    %cst_20 = arith.constant 2.000000e+00 : f32
    %59 = vector.broadcast %cst_20 : f32 to vector<64x32xf32>
    %60 = arith.mulf %59, %58 : vector<64x32xf32>
    %61 = vector.broadcast %55 : vector<64x1xf32> to vector<64x32xf32>
    %62 = arith.subf %61, %60 : vector<64x32xf32>
    %63 = vector.broadcast %10 : vector<1x32xf32> to vector<64x32xf32>
    %64 = arith.addf %62, %63 : vector<64x32xf32>
    %65 = arith.cmpf one, %64, %64 : vector<64x32xf32>
    %cst_21 = arith.constant 0xFF800000 : f32
    %66 = vector.broadcast %cst_21 : f32 to vector<64x32xf32>
    %67 = arith.select %65, %66, %64 : vector<64x32xi1>, vector<64x32xf32>
    %cst_22 = arith.constant dense<0x7F800000> : vector<64xf32>
    %68 = vector.multi_reduction <minimumf>, %67, %cst_22 [1] : vector<64x32xf32> to vector<64xf32>
    %69 = vector.shape_cast %68 : vector<64xf32> to vector<64x1xf32>
    %70 = tpu.iota {dimensions = array<i32: 1>} : vector<64x32xi32>
    %71 = vector.broadcast %69 : vector<64x1xf32> to vector<64x32xf32>
    %72 = arith.cmpf oeq, %67, %71 : vector<64x32xf32>
    %c32_i32 = arith.constant 32 : i32
    %73 = vector.broadcast %c32_i32 : i32 to vector<64x32xi32>
    %74 = arith.select %72, %70, %73 : vector<64x32xi1>, vector<64x32xi32>
    %cst_23 = arith.constant dense<2147483647> : vector<64xi32>
    %75 = vector.multi_reduction <minsi>, %74, %cst_23 [1] : vector<64x32xi32> to vector<64xi32>
    %76 = vector.shape_cast %75 : vector<64xi32> to vector<64x1xi32>
    %77 = vector.broadcast %76 : vector<64x1xi32> to vector<64x32xi32>
    %78 = arith.cmpi eq, %70, %77 : vector<64x32xi32>
    %79 = arith.extui %78 : vector<64x32xi1> to vector<64x32xi32>
    %80 = arith.sitofp %79 : vector<64x32xi32> to vector<64x32xf32>
    %81 = arith.mulf %80, %56 : vector<64x32xf32>
    %cst_24 = arith.constant dense<0.000000e+00> : vector<64xf32>
    %82 = vector.multi_reduction <add>, %81, %cst_24 [1] : vector<64x32xf32> to vector<64xf32>
    %83 = vector.shape_cast %82 : vector<64xf32> to vector<8x8xf32>
    %84 = arith.subf %83, %44 : vector<8x8xf32>
    %85 = arith.mulf %84, %84 : vector<8x8xf32>
    %86 = vector.shape_cast %85 : vector<8x8xf32> to vector<1x8x8xf32>
    %cst_25 = arith.constant dense<0.000000e+00> : vector<1xf32>
    %87 = vector.multi_reduction <add>, %86, %cst_25 [1, 2] : vector<1x8x8xf32> to vector<1xf32>
    %88 = vector.shape_cast %87 : vector<1xf32> to vector<1x1x1xf32>
    %89 = vector.extract %88[0, 0, 0] : f32 from vector<1x1x1xf32>
    %90 = vector.broadcast %89 : f32 to vector<1x1xf32>
    %cst_26 = arith.constant 6.400000e+01 : f32
    %91 = vector.broadcast %cst_26 : f32 to vector<1x1xf32>
    %92 = arith.divf %90, %91 : vector<1x1xf32>
    %cst_27 = arith.constant 1.250000e+00 : f32
    %93 = vector.broadcast %cst_27 : f32 to vector<1x1xf32>
    %94 = arith.mulf %92, %93 : vector<1x1xf32>
    %c8 = arith.constant 8 : index
    %c0_28 = arith.constant 0 : index
    %95 = vector.load %arg4[%c8, %c0_28] : memref<16x64xf32, #tpu.memory_space<vmem>>, vector<8x64xf32>
    %cst_29 = arith.constant dense<0.000000e+00> : vector<8x32xf32>
    %96 = tpu.matmul %95, %80, %cst_29 {dimension_numbers = #tpu.dot_dimension_numbers<[1], [0], [0], [1], [0, 0, 1, 1], [], []>} : vector<8x64xf32>, vector<64x32xf32>, vector<8x32xf32> -> vector<8x32xf32>
    %cst_30 = arith.constant 1.000000e-10 : f32
    %97 = vector.broadcast %cst_30 : f32 to vector<8x32xf32>
    %98 = arith.addf %96, %97 : vector<8x32xf32>
    %99 = math.log %98 : vector<8x32xf32>
    %100 = arith.mulf %96, %99 : vector<8x32xf32>
    %101 = vector.shape_cast %100 : vector<8x32xf32> to vector<1x8x32xf32>
    %cst_31 = arith.constant dense<0.000000e+00> : vector<1xf32>
    %102 = vector.multi_reduction <add>, %101, %cst_31 [1, 2] : vector<1x8x32xf32> to vector<1xf32>
    %103 = vector.shape_cast %102 : vector<1xf32> to vector<1x1x1xf32>
    %104 = vector.extract %103[0, 0, 0] : f32 from vector<1x1x1xf32>
    %105 = vector.broadcast %104 : f32 to vector<1x1xf32>
    %cst_32 = arith.constant 0.000000e+00 : f32
    %106 = vector.broadcast %cst_32 : f32 to vector<1x1xf32>
    %107 = arith.subf %106, %105 : vector<1x1xf32>
    %108 = math.exp %107 : vector<1x1xf32>
    %109 = vector.extract_strided_slice %0 {offsets = [0, 48], sizes = [8, 8], strides = [1, 1]} : vector<8x64xf32> to vector<8x8xf32>
    %110 = tpu.concatenate %83, %109 in 1 : vector<8x8xf32>, vector<8x8xf32> -> vector<8x16xf32>
    %111 = arith.truncf %110 : vector<8x16xf32> to vector<8x16xbf16>
    %c96 = arith.constant 96 : index
    %c0_33 = arith.constant 0 : index
    %112 = vector.load %arg2[%c96, %c0_33] : memref<160x64xbf16, #tpu.memory_space<vmem>>, vector<16x12xbf16>
    %cst_34 = arith.constant dense<0.000000e+00> : vector<8x12xf32>
    %113 = tpu.matmul %111, %112, %cst_34 {dimension_numbers = #tpu.dot_dimension_numbers<[1], [0], [0], [1], [0, 0, 1, 1], [], []>} : vector<8x16xbf16>, vector<16x12xbf16>, vector<8x12xf32> -> vector<8x12xf32>
    %114 = vector.broadcast %6 : vector<1x12xf32> to vector<8x12xf32>
    %115 = arith.addf %113, %114 : vector<8x12xf32>
    %cst_35 = arith.constant 0.000000e+00 : f32
    %116 = vector.broadcast %cst_35 : f32 to vector<8x12xf32>
    %117 = arith.maximumf %115, %116 : vector<8x12xf32>
    %118 = arith.truncf %117 : vector<8x12xf32> to vector<8x12xbf16>
    %c112 = arith.constant 112 : index
    %c0_36 = arith.constant 0 : index
    %119 = vector.load %arg2[%c112, %c0_36] : memref<160x64xbf16, #tpu.memory_space<vmem>>, vector<12x16xbf16>
    %cst_37 = arith.constant dense<0.000000e+00> : vector<8x16xf32>
    %120 = tpu.matmul %118, %119, %cst_37 {dimension_numbers = #tpu.dot_dimension_numbers<[1], [0], [0], [1], [0, 0, 1, 1], [], []>} : vector<8x12xbf16>, vector<12x16xbf16>, vector<8x16xf32> -> vector<8x16xf32>
    %121 = vector.broadcast %7 : vector<1x16xf32> to vector<8x16xf32>
    %122 = arith.addf %120, %121 : vector<8x16xf32>
    %123 = arith.subf %122, %1 : vector<8x16xf32>
    %124 = arith.mulf %123, %123 : vector<8x16xf32>
    %125 = vector.shape_cast %124 : vector<8x16xf32> to vector<1x8x16xf32>
    %cst_38 = arith.constant dense<0.000000e+00> : vector<1xf32>
    %126 = vector.multi_reduction <add>, %125, %cst_38 [1, 2] : vector<1x8x16xf32> to vector<1xf32>
    %127 = vector.shape_cast %126 : vector<1xf32> to vector<1x1x1xf32>
    %128 = vector.extract %127[0, 0, 0] : f32 from vector<1x1x1xf32>
    %129 = vector.broadcast %128 : f32 to vector<1x1xf32>
    %cst_39 = arith.constant 8.000000e+00 : f32
    %130 = vector.broadcast %cst_39 : f32 to vector<1x1xf32>
    %131 = arith.divf %129, %130 : vector<1x1xf32>
    %132 = tpu.concatenate %41, %94, %108, %131 in 1 : vector<1x1xf32>, vector<1x1xf32>, vector<1x1xf32>, vector<1x1xf32> -> vector<1x4xf32>
    %c0_40 = arith.constant 0 : index
    %c0_41 = arith.constant 0 : index
    %133 = vector.load %arg9[%c0_40, %c0_41] : memref<1x4xf32, #tpu.memory_space<vmem>>, vector<1x4xf32>
    tpu.vector_store %arg9[%c0_40, %c0_41], %132 {strides = array<i32>} : memref<1x4xf32, #tpu.memory_space<vmem>>, vector<1x4xf32>,
    %134 = vector.shape_cast %45 : vector<8x8xf32> to vector<8x8x1xf32>
    %135 = vector.shape_cast %45 : vector<8x8xf32> to vector<8x1x8xf32>
    %136 = vector.broadcast %134 : vector<8x8x1xf32> to vector<8x8x8xf32>
    %137 = vector.broadcast %135 : vector<8x1x8xf32> to vector<8x8x8xf32>
    %138 = arith.mulf %136, %137 : vector<8x8x8xf32>
    %139 = vector.shape_cast %138 : vector<8x8x8xf32> to vector<64x8xf32>
    %140 = arith.truncf %139 : vector<64x8xf32> to vector<64x8xbf16>
    %c128 = arith.constant 128 : index
    %c0_42 = arith.constant 0 : index
    %141 = vector.load %arg2[%c128, %c0_42] : memref<160x64xbf16, #tpu.memory_space<vmem>>, vector<8x8xbf16>
    %cst_43 = arith.constant dense<0.000000e+00> : vector<64x8xf32>
    %142 = tpu.matmul %140, %141, %cst_43 {dimension_numbers = #tpu.dot_dimension_numbers<[1], [0], [0], [1], [0, 0, 1, 1], [], []>} : vector<64x8xbf16>, vector<8x8xbf16>, vector<64x8xf32> -> vector<64x8xf32>
    %143 = vector.broadcast %8 : vector<1x8xf32> to vector<64x8xf32>
    %144 = arith.addf %142, %143 : vector<64x8xf32>
    %c0_44 = arith.constant 0 : index
    %c0_45 = arith.constant 0 : index
    %145 = vector.load %arg6[%c0_44, %c0_45] : memref<8x128xf32, #tpu.memory_space<vmem>>, vector<8x128xf32>
    %cst_46 = arith.constant dense<0.000000e+00> : vector<64x128xf32>
    %146 = tpu.matmul %144, %145, %cst_46 {dimension_numbers = #tpu.dot_dimension_numbers<[1], [0], [0], [1], [0, 0, 1, 1], [], []>} : vector<64x8xf32>, vector<8x128xf32>, vector<64x128xf32> -> vector<64x128xf32>
    %cst_47 = arith.constant dense<0xFF800000> : vector<64xf32>
    %147 = vector.multi_reduction <maximumf>, %146, %cst_47 [1] : vector<64x128xf32> to vector<64xf32>
    %148 = vector.shape_cast %147 : vector<64xf32> to vector<64x1xf32>
    %149 = vector.broadcast %148 : vector<64x1xf32> to vector<64x128xf32>
    %150 = arith.subf %146, %149 : vector<64x128xf32>
    %151 = math.exp %150 : vector<64x128xf32>
    %c0_48 = arith.constant 0 : index
    %c0_49 = arith.constant 0 : index
    %152 = vector.load %arg7[%c0_48, %c0_49] : memref<128x16xf32, #tpu.memory_space<vmem>>, vector<128x16xf32>
    %cst_50 = arith.constant dense<0.000000e+00> : vector<64x16xf32>
    %153 = tpu.matmul %151, %152, %cst_50 {dimension_numbers = #tpu.dot_dimension_numbers<[1], [0], [0], [1], [0, 0, 1, 1], [], []>} : vector<64x128xf32>, vector<128x16xf32>, vector<64x16xf32> -> vector<64x16xf32>
    %154 = vector.extract_strided_slice %153 {offsets = [0, 8], sizes = [64, 8], strides = [1, 1]} : vector<64x16xf32> to vector<64x8xf32>
    %155 = tpu.reciprocal %154 {approx = true} : vector<64x8xf32> -> vector<64x8xf32>
    %156 = vector.extract_strided_slice %153 {offsets = [0, 0], sizes = [64, 8], strides = [1, 1]} : vector<64x16xf32> to vector<64x8xf32>
    %157 = arith.mulf %156, %155 : vector<64x8xf32>
    %c0_51 = arith.constant 0 : index
    %c0_52 = arith.constant 0 : index
    %158 = vector.load %arg4[%c0_51, %c0_52] : memref<16x64xf32, #tpu.memory_space<vmem>>, vector<8x64xf32>
    %cst_53 = arith.constant dense<0.000000e+00> : vector<8x8xf32>
    %159 = tpu.matmul %158, %157, %cst_53 {dimension_numbers = #tpu.dot_dimension_numbers<[1], [0], [0], [1], [0, 0, 1, 1], [], []>} : vector<8x64xf32>, vector<64x8xf32>, vector<8x8xf32> -> vector<8x8xf32>
    %160 = arith.truncf %159 : vector<8x8xf32> to vector<8x8xbf16>
    %c144 = arith.constant 144 : index
    %c0_54 = arith.constant 0 : index
    %161 = vector.load %arg2[%c144, %c0_54] : memref<160x64xbf16, #tpu.memory_space<vmem>>, vector<8x16xbf16>
    %cst_55 = arith.constant dense<0.000000e+00> : vector<8x16xf32>
    %162 = tpu.matmul %160, %161, %cst_55 {dimension_numbers = #tpu.dot_dimension_numbers<[1], [0], [0], [1], [0, 0, 1, 1], [], []>} : vector<8x8xbf16>, vector<8x16xbf16>, vector<8x16xf32> -> vector<8x16xf32>
    %163 = vector.broadcast %9 : vector<1x16xf32> to vector<8x16xf32>
    %164 = arith.addf %162, %163 : vector<8x16xf32>
    %c0_56 = arith.constant 0 : index
    %c0_57 = arith.constant 0 : index
    %165 = vector.load %arg8[%c0_56, %c0_57] : memref<8x16xf32, #tpu.memory_space<vmem>>, vector<8x16xf32>
    tpu.vector_store %arg8[%c0_56, %c0_57], %164 {strides = array<i32>} : memref<8x16xf32, #tpu.memory_space<vmem>>, vector<8x16xf32>,
    return
  }
  func.func @transform_0(%arg0: i32) -> (i32, i32) {
    %c0_i32 = arith.constant 0 : i32
    %c0_i32_0 = arith.constant 0 : i32
    %c0_i32_1 = arith.constant 0 : i32
    return %c0_i32, %c0_i32_0 : i32, i32
  }
  func.func @transform_1(%arg0: i32) -> (i32, i32) {
    %c0_i32 = arith.constant 0 : i32
    %c0_i32_0 = arith.constant 0 : i32
    %c0_i32_1 = arith.constant 0 : i32
    return %c0_i32, %c0_i32_0 : i32, i32
  }
  func.func @transform_2(%arg0: i32) -> (i32, i32) {
    %c0_i32 = arith.constant 0 : i32
    %c0_i32_0 = arith.constant 0 : i32
    %c0_i32_1 = arith.constant 0 : i32
    return %c0_i32, %c0_i32_0 : i32, i32
  }
  func.func @transform_3(%arg0: i32) -> (i32, i32) {
    %c0_i32 = arith.constant 0 : i32
    %c0_i32_0 = arith.constant 0 : i32
    %c0_i32_1 = arith.constant 0 : i32
    return %c0_i32, %c0_i32_0 : i32, i32
  }
  func.func @transform_4(%arg0: i32) -> (i32, i32) {
    %c0_i32 = arith.constant 0 : i32
    %c0_i32_0 = arith.constant 0 : i32
    %c0_i32_1 = arith.constant 0 : i32
    return %c0_i32, %c0_i32_0 : i32, i32
  }
  func.func @transform_5(%arg0: i32) -> (i32, i32) {
    %c0_i32 = arith.constant 0 : i32
    %c0_i32_0 = arith.constant 0 : i32
    %c0_i32_1 = arith.constant 0 : i32
    return %c0_i32, %c0_i32_0 : i32, i32
  }
  func.func @transform_6(%arg0: i32) -> (i32, i32) {
    %c0_i32 = arith.constant 0 : i32
    %c0_i32_0 = arith.constant 0 : i32
    %c0_i32_1 = arith.constant 0 : i32
    return %c0_i32, %c0_i32_0 : i32, i32
  }
  func.func @transform_7(%arg0: i32) -> (i32, i32) {
    %c0_i32 = arith.constant 0 : i32
    %c0_i32_0 = arith.constant 0 : i32
    %c0_i32_1 = arith.constant 0 : i32
    return %c0_i32, %c0_i32_0 : i32, i32
  }
  func.func @transform_8(%arg0: i32) -> (i32, i32) {
    %c0_i32 = arith.constant 0 : i32
    %c0_i32_0 = arith.constant 0 : i32
    %c0_i32_1 = arith.constant 0 : i32
    return %c0_i32, %c0_i32_0 : i32, i32
  }
}

</mosaic_0001>

<llo_original>
// kernel: dalle_pallas.1
$region0: #{dalle_pallas.1}
  #allocation0 [shape = 'u32[]', space=smem, size = 0x4, offset = 0x4, fixed_abs, tag = 'smem constant byte address 0x4 - core index']
  #allocation1 [shape = 'u32[144,128]{1,0:T(1,128)}', space=vmem, size = 0x12000, scoped, tag = 'internal scratch']
  %s0 = inlined_call_operand.vmem [shape: f32[8,64], index: 0, kind: input, shape index: {}]
  %s1 = inlined_call_operand.vmem [shape: bf16[160,64], index: 1, kind: input, shape index: {}]
  %s2 = inlined_call_operand.vmem [shape: f32[8,64], index: 2, kind: input, shape index: {}]
  %s3 = inlined_call_operand.vmem [shape: f32[16,64], index: 3, kind: input, shape index: {}]
  %s4 = inlined_call_operand.vmem [shape: f32[64,32], index: 4, kind: input, shape index: {}]
  %s5 = inlined_call_operand.vmem [shape: f32[8,128], index: 5, kind: input, shape index: {}]
  %s6 = inlined_call_operand.vmem [shape: f32[128,16], index: 6, kind: input, shape index: {}]
  %s7 = inlined_call_operand.hbm [shape: f32[8,16], index: 7, kind: output, shape index: {0}]
  %s8 = inlined_call_operand.vmem [shape: f32[1,4], index: 8, kind: output, shape index: {1}]
  %9 = xla_tuple %s7, %s8
  %s10 = sld [smem:[#allocation0]]
  $region46: #{dalle_pallas.1} parent=0
    _
  %s12 = ssub.s32 1, %s10
  %s13 = scalar_select 0, %s12, %s10
  $region1: #{dalle_pallas.1} parent=0
    #allocation2 [shape = 'u8[4096]{0}', space=vmem, size = 0x1000, scoped, tag = 'output window, operand 0, single buffered']
    #allocation3 [shape = 's32[1]{0}', space=sflag, size = 0x4, scoped, tag = 'scoped memory for dalle_pallas.1']
    %14 = vsyncpa [#allocation3], 0
    // Predicated region
    $region2: #{dalle_pallas.1} parent=1 // pred_check
      _
    $region3: #{dalle_pallas.1} parent=1 // pred_check_branch
      %16 = sbr.rel (0) target = $region5
    $region4: #{dalle_pallas.1} parent=1 // pred_region
      _
    $region5: #{dalle_pallas.1} parent=1 // pred_fallthru
      _
    // Predicated region
    $region6: #{dalle_pallas.1} parent=1 // pred_check
      _
    $region7: #{dalle_pallas.1} parent=1 // pred_check_branch
      %18 = sbr.rel (0) target = $region9
    $region8: #{dalle_pallas.1} parent=1 // pred_region
      _
    $region9: #{dalle_pallas.1} parent=1 // pred_fallthru
      _
    // Predicated region
    $region10: #{dalle_pallas.1} parent=1 // pred_check
      _
    $region11: #{dalle_pallas.1} parent=1 // pred_check_branch
      %20 = sbr.rel (0) target = $region13
    $region12: #{dalle_pallas.1} parent=1 // pred_region
      _
    $region13: #{dalle_pallas.1} parent=1 // pred_fallthru
      _
    // Predicated region
    $region14: #{dalle_pallas.1} parent=1 // pred_check
      _
    $region15: #{dalle_pallas.1} parent=1 // pred_check_branch
      %22 = sbr.rel (0) target = $region17
    $region16: #{dalle_pallas.1} parent=1 // pred_region
      _
    $region17: #{dalle_pallas.1} parent=1 // pred_fallthru
      _
    // Predicated region
    $region18: #{dalle_pallas.1} parent=1 // pred_check
      _
    $region19: #{dalle_pallas.1} parent=1 // pred_check_branch
      %24 = sbr.rel (0) target = $region21
    $region20: #{dalle_pallas.1} parent=1 // pred_region
      _
    $region21: #{dalle_pallas.1} parent=1 // pred_fallthru
      _
    // Predicated region
    $region22: #{dalle_pallas.1} parent=1 // pred_check
      _
    $region23: #{dalle_pallas.1} parent=1 // pred_check_branch
      %26 = sbr.rel (0) target = $region25
    $region24: #{dalle_pallas.1} parent=1 // pred_region
      _
    $region25: #{dalle_pallas.1} parent=1 // pred_fallthru
      _
    // Predicated region
    $region26: #{dalle_pallas.1} parent=1 // pred_check
      _
    $region27: #{dalle_pallas.1} parent=1 // pred_check_branch
      %28 = sbr.rel (0) target = $region29
    $region28: #{dalle_pallas.1} parent=1 // pred_region
      _
    $region29: #{dalle_pallas.1} parent=1 // pred_fallthru
      _
    %v30 = vld [vmem:[%s0] sm:$0xff]
    %v31 = vld [vmem:[%s2] sm:$0x1]
    %v32 = vld [vmem:[%s2 + $0x1] sm:$0x1]
    %v33 = vld [vmem:[%s2 + $0x2] sm:$0x1]
    %v34 = vld [vmem:[%s2 + $0x3] sm:$0x1]
    %v35 = vld [vmem:[%s2 + $0x4] sm:$0x1]
    %v36 = vld [vmem:[%s2 + $0x5] sm:$0x1]
    %v37 = vld [vmem:[%s2 + $0x6] sm:$0x1]
    %v38 = vpack.c.bf16 %v30, %v30
    %v39 = vld [vmem:[%s1] sm:$0xf]
    %v40 = vld [vmem:[%s1 + $0x4] sm:$0xf]
    %v41 = vld [vmem:[%s1 + $0x8] sm:$0xf]
    %v42 = vld [vmem:[%s1 + $0xc] sm:$0xf]
    %v43 = vlaneseq
    %v44 = vshrl.u32 %v43, 7
    %v45 = vsub.s32 0, %v44
    %v46 = vrot.slane %v31, %v45
    %v51 = vunpack.c.l.b16 %v39
    %v52 = vunpack.c.l.b16 %v40
    %v53 = vunpack.c.l.b16 %v41
    %v54 = vunpack.c.l.b16 %v42
    %v55 = vpack.c.b16 %v52, %v51
    %v56 = vpack.c.b16 %v54, %v53
    %vm59 = vcmask 261120
    %v61 = vsel %vm59, %v38, 0
    %63 = vmatprep.subr.bf16.mxu0 0
    %64 = vmatpush1.bf16.msra.mxu0 0
    %65 = vmatprep.subr.bf16.mxu0 0
    %66 = vmatpush1.bf16.msra.mxu0 0
    %67 = vmatprep.subr.bf16.mxu0 0
    %68 = vmatpush1.bf16.msra.mxu0 0
    %69 = vmatprep.subr.bf16.mxu0 0
    %70 = vmatpush1.bf16.msra.mxu0 0
    %71 = vmatprep.subr.bf16.mxu0 0
    %72 = vmatpush1.bf16.msra.mxu0 0
    %73 = vmatprep.subr.bf16.mxu0 0
    %74 = vmatpush1.bf16.msra.mxu0 0
    %75 = vmatprep.subr.bf16.mxu0 0
    %76 = vmatpush1.bf16.msra.mxu0 %v56
    %77 = vmatprep.subr.bf16.mxu0 0
    %78 = vmatpush1.bf16.msra.mxu0 %v55
    %79 = vmatprep.subr.bf16.mxu0 0
    %80 = vmatpush2.bf16.msra.mxu0 0
    %81 = vmatprep.subr.bf16.mxu0 0
    %82 = vmatpush2.bf16.msra.mxu0 0
    %83 = vmatprep.subr.bf16.mxu0 0
    %84 = vmatpush2.bf16.msra.mxu0 0
    %85 = vmatprep.subr.bf16.mxu0 0
    %86 = vmatpush2.bf16.msra.mxu0 0
    %87 = vmatprep.subr.bf16.mxu0 0
    %88 = vmatpush2.bf16.msra.mxu0 0
    %89 = vmatprep.subr.bf16.mxu0 0
    %90 = vmatpush2.bf16.msra.mxu0 0
    %91 = vmatprep.subr.bf16.mxu0 0
    %92 = vmatpush2.bf16.msra.mxu0 0
    %93 = vmatprep.subr.bf16.mxu0 0
    %94 = vmatpush2.bf16.msra.mxu0 0
    %95 = vmatprep.mubr.bf16.mxu0 0
    %96 = vmatmul.mubr.bf16.gmra.mxu0 %v61
    %v97 = vpop.f32.mrf.mxu0
    %v98 = vadd.f32 %v46, %v97
    %v99 = vpop.f32.mrf.mxu0
    %v100 = vpop.f32.mrf.mxu0
    %v101 = vpop.f32.mrf.mxu0
    %102 = vdwg.mxu0
    %v103 = vmax.f32 %v98, 0.0
    %v104 = vpack.c.bf16 %v103, %v103
    %v105 = vld [vmem:[%s1 + $0x10] sm:$0xf]
    %v106 = vld [vmem:[%s1 + $0x14] sm:$0xf]
    %v107 = vld [vmem:[%s1 + $0x18] sm:$0xf]
    %v108 = vld [vmem:[%s1 + $0x1c] sm:$0xf]
    %v109 = vld [vmem:[%s1 + $0x20] sm:$0xf]
    %v110 = vld [vmem:[%s1 + $0x24] sm:$0xf]
    %v111 = vld [vmem:[%s1 + $0x28] sm:$0xf]
    %v112 = vld [vmem:[%s1 + $0x2c] sm:$0xf]
    %v113 = vlaneseq
    %v114 = vshrl.u32 %v113, 7
    %v115 = vsub.s32 0, %v114
    %v116 = vrot.slane %v32, %v115
    %v125 = vunpack.c.l.b16 %v105
    %v126 = vunpack.c.l.b16 %v106
    %v127 = vunpack.c.l.b16 %v107
    %v128 = vunpack.c.l.b16 %v108
    %v129 = vunpack.c.l.b16 %v109
    %v130 = vunpack.c.l.b16 %v110
    %v131 = vunpack.c.l.b16 %v111
    %v132 = vunpack.c.l.b16 %v112
    %v133 = vpack.c.b16 %v126, %v125
    %v134 = vpack.c.b16 %v128, %v127
    %v135 = vpack.c.b16 %v130, %v129
    %v136 = vpack.c.b16 %v132, %v131
    %vm141 = vcmask 523264
    %v143 = vsel %vm141, %v104, 0
    %145 = vmatprep.subr.bf16.mxu0 0
    %146 = vmatpush1.bf16.msra.mxu0 0
    %147 = vmatprep.subr.bf16.mxu0 0
    %148 = vmatpush1.bf16.msra.mxu0 0
    %149 = vmatprep.subr.bf16.mxu0 0
    %150 = vmatpush1.bf16.msra.mxu0 0
    %151 = vmatprep.subr.bf16.mxu0 0
    %152 = vmatpush1.bf16.msra.mxu0 0
    %153 = vmatprep.subr.bf16.mxu0 0
    %154 = vmatpush1.bf16.msra.mxu0 %v136
    %155 = vmatprep.subr.bf16.mxu0 0
    %156 = vmatpush1.bf16.msra.mxu0 %v135
    %157 = vmatprep.subr.bf16.mxu0 0
    %158 = vmatpush1.bf16.msra.mxu0 %v134
    %159 = vmatprep.subr.bf16.mxu0 0
    %160 = vmatpush1.bf16.msra.mxu0 %v133
    %161 = vmatprep.subr.bf16.mxu0 0
    %162 = vmatpush2.bf16.msra.mxu0 0
    %163 = vmatprep.subr.bf16.mxu0 0
    %164 = vmatpush2.bf16.msra.mxu0 0
    %165 = vmatprep.subr.bf16.mxu0 0
    %166 = vmatpush2.bf16.msra.mxu0 0
    %167 = vmatprep.subr.bf16.mxu0 0
    %168 = vmatpush2.bf16.msra.mxu0 0
    %169 = vmatprep.subr.bf16.mxu0 0
    %170 = vmatpush2.bf16.msra.mxu0 0
    %171 = vmatprep.subr.bf16.mxu0 0
    %172 = vmatpush2.bf16.msra.mxu0 0
    %173 = vmatprep.subr.bf16.mxu0 0
    %174 = vmatpush2.bf16.msra.mxu0 0
    %175 = vmatprep.subr.bf16.mxu0 0
    %176 = vmatpush2.bf16.msra.mxu0 0
    %177 = vmatprep.mubr.bf16.mxu0 0
    %178 = vmatmul.mubr.bf16.gmra.mxu0 %v143
    %v179 = vpop.f32.mrf.mxu0
    %v180 = vadd.f32 %v116, %v179
    %v181 = vpop.f32.mrf.mxu0
    %v182 = vpop.f32.mrf.mxu0
    %v183 = vpop.f32.mrf.mxu0
    %184 = vdwg.mxu0
    %v185 = vmul.f32 %v180, 0.5
    %v186 = vmul.f32 %v185, 1.442695
    %v187 = vpow.pop %v186
    %189 = vrot.lane.b32.xlu0 %v180, 120
    %v190 = vpop.permute.xlu0 %189
    %v192 = vsub.f32 %v180, %v190
    %194 = vrot.lane.b32.xlu0 %v187, 120
    %v195 = vpop.permute.xlu0 %194
    %v197 = vsub.f32 %v187, %v195
    %v198 = vmul.f32 %v192, %v192
    %v199 = vmul.f32 %v197, %v197
    %201 = vrot.lane.b32.xlu0 %v199, 112
    %v202 = vpop.permute.xlu0 %201
    %v204 = vadd.f32 %v198, %v202
    %vm205 = vcmask 64512
    %v206 = vsel %vm205, %v204, 0.0
    %207 = vadd.xlane.f32.xlu0 %v206
    %v208 = vpop.xlane.xlu0 %207
    %v209 = vrot.slane %v208, 4
    %v210 = vadd.f32 %v208, %v209
    %v211 = vrot.slane %v210, 2
    %v212 = vadd.f32 %v210, %v211
    %v213 = vrot.slane %v212, 1
    %v214 = vadd.f32 %v212, %v213
    %s215 = vtos %v214
    %v216 = vstv %s215
    %218 = vrot.lane.b32.xlu0 %v30, 112
    %v219 = vpop.permute.xlu0 %218
    %v221 = vmul.f32 %v187, %v219
    %223 = vrot.lane.b32.xlu0 %v221, 112
    %v224 = vpop.permute.xlu0 %223
    %v226 = vadd.f32 %v180, %v224
    %v227 = vlaneseq
    %v228 = vshrl.u32 %v227, 7
    %v229 = vsub.s32 0, %v228
    %v230 = vrot.slane %v226, %v229
    %232 = vbcast.lane.b32.xlu0 %v230, 256
    %v233 = vpop.permute.xlu0 %232
    %v234 = vlaneseq
    %v235 = vshrl.u32 %v234, 7
    %v236 = vsub.s32 1, %v235
    %v237 = vrot.slane %v226, %v236
    %239 = vbcast.lane.b32.xlu0 %v237, 256
    %v240 = vpop.permute.xlu0 %239
    %v241 = vlaneseq
    %v242 = vshrl.u32 %v241, 7
    %v243 = vsub.s32 2, %v242
    %v244 = vrot.slane %v226, %v243
    %246 = vbcast.lane.b32.xlu0 %v244, 256
    %v247 = vpop.permute.xlu0 %246
    %v248 = vlaneseq
    %v249 = vshrl.u32 %v248, 7
    %v250 = vsub.s32 3, %v249
    %v251 = vrot.slane %v226, %v250
    %253 = vbcast.lane.b32.xlu0 %v251, 256
    %v254 = vpop.permute.xlu0 %253
    %v255 = vlaneseq
    %v256 = vshrl.u32 %v255, 7
    %v257 = vsub.s32 4, %v256
    %v258 = vrot.slane %v226, %v257
    %260 = vbcast.lane.b32.xlu0 %v258, 256
    %v261 = vpop.permute.xlu0 %260
    %v262 = vlaneseq
    %v263 = vshrl.u32 %v262, 7
    %v264 = vsub.s32 5, %v263
    %v265 = vrot.slane %v226, %v264
    %267 = vbcast.lane.b32.xlu0 %v265, 256
    %v268 = vpop.permute.xlu0 %267
    %v269 = vlaneseq
    %v270 = vshrl.u32 %v269, 7
    %v271 = vsub.s32 6, %v270
    %v272 = vrot.slane %v226, %v271
    %274 = vbcast.lane.b32.xlu0 %v272, 256
    %v275 = vpop.permute.xlu0 %274
    %v276 = vlaneseq
    %v277 = vshrl.u32 %v276, 7
    %v278 = vsub.s32 7, %v277
    %v279 = vrot.slane %v226, %v278
    %281 = vbcast.lane.b32.xlu0 %v279, 256
    %v282 = vpop.permute.xlu0 %281
    %v284 = vcombine.high %v226, %v226
    %v286 = vunpack.c.l.s4 1966171168
    %v287 = vunpack.c.0.s8 %v286
    %v288 = vlaneseq
    %v289 = vshrl.u32 %v288, 7
    %v290 = vsub.s32 %v287, %v289
    %v291 = vrot.slane %v226, %v290
    %v293 = vunpack.c.l.s4 1966171168
    %v294 = vunpack.c.0.s8 %v293
    %v295 = vlaneseq
    %v296 = vshrl.u32 %v295, 7
    %v297 = vsub.s32 %v294, %v296
    %v298 = vrot.slane %v284, %v297
    %v299 = vcombine.high %v291, %v291
    %v300 = vcombine.high %v298, %v298
    %v302 = vunpack.c.l.s4 1966171168
    %v303 = vunpack.c.0.s8 %v302
    %v304 = vlaneseq
    %v305 = vshrl.u32 %v304, 7
    %v306 = vsub.s32 %v303, %v305
    %v307 = vrot.slane %v291, %v306
    %v309 = vunpack.c.l.s4 1966171168
    %v310 = vunpack.c.0.s8 %v309
    %v311 = vlaneseq
    %v312 = vshrl.u32 %v311, 7
    %v313 = vsub.s32 %v310, %v312
    %v314 = vrot.slane %v298, %v313
    %v316 = vunpack.c.l.s4 1966171168
    %v317 = vunpack.c.0.s8 %v316
    %v318 = vlaneseq
    %v319 = vshrl.u32 %v318, 7
    %v320 = vsub.s32 %v317, %v319
    %v321 = vrot.slane %v299, %v320
    %v323 = vunpack.c.l.s4 1966171168
    %v324 = vunpack.c.0.s8 %v323
    %v325 = vlaneseq
    %v326 = vshrl.u32 %v325, 7
    %v327 = vsub.s32 %v324, %v326
    %v328 = vrot.slane %v300, %v327
    %v329 = vcombine.high %v307, %v307
    %v330 = vcombine.high %v314, %v314
    %v331 = vcombine.high %v321, %v321
    %v332 = vcombine.high %v328, %v328
    %v333 = vlaneseq
    %v334 = vshrl.u32 %v333, 7
    %v335 = vsub.s32 0, %v334
    %v336 = vrot.slane %v307, %v335
    %v337 = vlaneseq
    %v338 = vshrl.u32 %v337, 7
    %v339 = vsub.s32 0, %v338
    %v340 = vrot.slane %v321, %v339
    %v341 = vlaneseq
    %v342 = vshrl.u32 %v341, 7
    %v343 = vsub.s32 0, %v342
    %v344 = vrot.slane %v329, %v343
    %v345 = vlaneseq
    %v346 = vshrl.u32 %v345, 7
    %v347 = vsub.s32 0, %v346
    %v348 = vrot.slane %v331, %v347
    %v349 = vlaneseq
    %v350 = vshrl.u32 %v349, 7
    %v351 = vsub.s32 0, %v350
    %v352 = vrot.slane %v314, %v351
    %v353 = vlaneseq
    %v354 = vshrl.u32 %v353, 7
    %v355 = vsub.s32 0, %v354
    %v356 = vrot.slane %v328, %v355
    %v357 = vlaneseq
    %v358 = vshrl.u32 %v357, 7
    %v359 = vsub.s32 0, %v358
    %v360 = vrot.slane %v330, %v359
    %v361 = vlaneseq
    %v362 = vshrl.u32 %v361, 7
    %v363 = vsub.s32 0, %v362
    %v364 = vrot.slane %v332, %v363
    %v373 = vmul.f32 %v233, %v336
    %v374 = vmul.f32 %v240, %v340
    %v375 = vmul.f32 %v247, %v344
    %v376 = vmul.f32 %v254, %v348
    %v377 = vmul.f32 %v261, %v352
    %v378 = vmul.f32 %v268, %v356
    %v379 = vmul.f32 %v275, %v360
    %v380 = vmul.f32 %v282, %v364
    %v381 = vrsqrt.pop %v373
    %v382 = vmul.f32 %v373, %v381
    %vm383 = vcmp.eq.f32.partialorder %v373, inf
    %v384 = vsel %vm383, %v373, %v382
    %vm385 = vcmp.eq.f32.partialorder %v373, 0.0
    %v386 = vand.u32 %v373, 2147483648
    %v387 = vsel %vm385, %v386, %v384
    %v388 = vrsqrt.pop %v374
    %v389 = vmul.f32 %v374, %v388
    %vm390 = vcmp.eq.f32.partialorder %v374, inf
    %v391 = vsel %vm390, %v374, %v389
    %vm392 = vcmp.eq.f32.partialorder %v374, 0.0
    %v393 = vand.u32 %v374, 2147483648
    %v394 = vsel %vm392, %v393, %v391
    %v395 = vrsqrt.pop %v375
    %v396 = vmul.f32 %v375, %v395
    %vm397 = vcmp.eq.f32.partialorder %v375, inf
    %v398 = vsel %vm397, %v375, %v396
    %vm399 = vcmp.eq.f32.partialorder %v375, 0.0
    %v400 = vand.u32 %v375, 2147483648
    %v401 = vsel %vm399, %v400, %v398
    %v402 = vrsqrt.pop %v376
    %v403 = vmul.f32 %v376, %v402
    %vm404 = vcmp.eq.f32.partialorder %v376, inf
    %v405 = vsel %vm404, %v376, %v403
    %vm406 = vcmp.eq.f32.partialorder %v376, 0.0
    %v407 = vand.u32 %v376, 2147483648
    %v408 = vsel %vm406, %v407, %v405
    %v409 = vrsqrt.pop %v377
    %v410 = vmul.f32 %v377, %v409
    %vm411 = vcmp.eq.f32.partialorder %v377, inf
    %v412 = vsel %vm411, %v377, %v410
    %vm413 = vcmp.eq.f32.partialorder %v377, 0.0
    %v414 = vand.u32 %v377, 2147483648
    %v415 = vsel %vm413, %v414, %v412
    %v416 = vrsqrt.pop %v378
    %v417 = vmul.f32 %v378, %v416
    %vm418 = vcmp.eq.f32.partialorder %v378, inf
    %v419 = vsel %vm418, %v378, %v417
    %vm420 = vcmp.eq.f32.partialorder %v378, 0.0
    %v421 = vand.u32 %v378, 2147483648
    %v422 = vsel %vm420, %v421, %v419
    %v423 = vrsqrt.pop %v379
    %v424 = vmul.f32 %v379, %v423
    %vm425 = vcmp.eq.f32.partialorder %v379, inf
    %v426 = vsel %vm425, %v379, %v424
    %vm427 = vcmp.eq.f32.partialorder %v379, 0.0
    %v428 = vand.u32 %v379, 2147483648
    %v429 = vsel %vm427, %v428, %v426
    %v430 = vrsqrt.pop %v380
    %v431 = vmul.f32 %v380, %v430
    %vm432 = vcmp.eq.f32.partialorder %v380, inf
    %v433 = vsel %vm432, %v380, %v431
    %vm434 = vcmp.eq.f32.partialorder %v380, 0.0
    %v435 = vand.u32 %v380, 2147483648
    %v436 = vsel %vm434, %v435, %v433
    %v437 = vmul.f32 %v387, %v387
    %v438 = vmul.f32 %v394, %v394
    %v439 = vmul.f32 %v401, %v401
    %v440 = vmul.f32 %v408, %v408
    %v441 = vmul.f32 %v415, %v415
    %v442 = vmul.f32 %v422, %v422
    %v443 = vmul.f32 %v429, %v429
    %v444 = vmul.f32 %v436, %v436
    %v445 = vsel %vm205, %v437, 0.0
    %446 = vadd.xlane.f32.xlu0 %v445
    %v447 = vpop.xlane.xlu0 %446
    %v448 = vsel %vm205, %v438, 0.0
    %449 = vadd.xlane.f32.xlu0 %v448
    %v450 = vpop.xlane.xlu0 %449
    %v451 = vsel %vm205, %v439, 0.0
    %452 = vadd.xlane.f32.xlu0 %v451
    %v453 = vpop.xlane.xlu0 %452
    %v454 = vsel %vm205, %v440, 0.0
    %455 = vadd.xlane.f32.xlu0 %v454
    %v456 = vpop.xlane.xlu0 %455
    %v457 = vsel %vm205, %v441, 0.0
    %458 = vadd.xlane.f32.xlu0 %v457
    %v459 = vpop.xlane.xlu0 %458
    %v460 = vsel %vm205, %v442, 0.0
    %461 = vadd.xlane.f32.xlu0 %v460
    %v462 = vpop.xlane.xlu0 %461
    %v463 = vsel %vm205, %v443, 0.0
    %464 = vadd.xlane.f32.xlu0 %v463
    %v465 = vpop.xlane.xlu0 %464
    %v466 = vsel %vm205, %v444, 0.0
    %467 = vadd.xlane.f32.xlu0 %v466
    %v468 = vpop.xlane.xlu0 %467
    %v469 = vld [vmem:[%s4] sm:$0xff]
    %v470 = vld [vmem:[%s4 + $0x8] sm:$0xff]
    %v471 = vld [vmem:[%s4 + $0x10] sm:$0xff]
    %v472 = vld [vmem:[%s4 + $0x18] sm:$0xff]
    %v473 = vld [vmem:[%s4 + $0x20] sm:$0xff]
    %v474 = vld [vmem:[%s4 + $0x28] sm:$0xff]
    %v475 = vld [vmem:[%s4 + $0x30] sm:$0xff]
    %v476 = vld [vmem:[%s4 + $0x38] sm:$0xff]
    %v478 = vsel %vm205, %v387, 0
    %v481 = vsel %vm205, %v394, 0
    %v484 = vsel %vm205, %v401, 0
    %v487 = vsel %vm205, %v408, 0
    %v490 = vsel %vm205, %v415, 0
    %v493 = vsel %vm205, %v422, 0
    %v496 = vsel %vm205, %v429, 0
    %v499 = vsel %vm205, %v436, 0
    %501 = vmatprep.subr.mxu0 0.0
    %502 = vmatpush1.msra.mxu0 0.0
    %503 = vmatprep.subr.mxu0 0.0
    %504 = vmatpush1.msra.mxu0 0.0
    %505 = vmatprep.subr.mxu0 0.0
    %506 = vmatpush1.msra.mxu0 0.0
    %507 = vmatprep.subr.mxu0 0.0
    %508 = vmatpush1.msra.mxu0 0.0
    %509 = vmatprep.subr.mxu0 0.0
    %510 = vmatpush1.msra.mxu0 0.0
    %511 = vmatprep.subr.mxu0 0.0
    %512 = vmatpush1.msra.mxu0 0.0
    %513 = vmatprep.subr.mxu0 0.0
    %514 = vmatpush1.msra.mxu0 0.0
    %515 = vmatprep.subr.mxu0 0.0
    %516 = vmatpush1.msra.mxu0 0.0
    %517 = vmatprep.subr.mxu0 0.0
    %518 = vmatpush1.msra.mxu0 0.0
    %519 = vmatprep.subr.mxu0 0.0
    %520 = vmatpush1.msra.mxu0 0.0
    %521 = vmatprep.subr.mxu0 0.0
    %522 = vmatpush1.msra.mxu0 0.0
    %523 = vmatprep.subr.mxu0 0.0
    %524 = vmatpush1.msra.mxu0 0.0
    %525 = vmatprep.subr.mxu0 0.0
    %526 = vmatpush1.msra.mxu0 0.0
    %527 = vmatprep.subr.mxu0 0.0
    %528 = vmatpush1.msra.mxu0 0.0
    %529 = vmatprep.subr.mxu0 0.0
    %530 = vmatpush1.msra.mxu0 0.0
    %531 = vmatprep.subr.mxu0 0.0
    %532 = vmatpush1.msra.mxu0 %v469
    %533 = vmatprep.subr.mxu0 0.0
    %534 = vmatpush2.msra.mxu0 0.0
    %535 = vmatprep.subr.mxu0 0.0
    %536 = vmatpush2.msra.mxu0 0.0
    %537 = vmatprep.subr.mxu0 0.0
    %538 = vmatpush2.msra.mxu0 0.0
    %539 = vmatprep.subr.mxu0 0.0
    %540 = vmatpush2.msra.mxu0 0.0
    %541 = vmatprep.subr.mxu0 0.0
    %542 = vmatpush2.msra.mxu0 0.0
    %543 = vmatprep.subr.mxu0 0.0
    %544 = vmatpush2.msra.mxu0 0.0
    %545 = vmatprep.subr.mxu0 0.0
    %546 = vmatpush2.msra.mxu0 0.0
    %547 = vmatprep.subr.mxu0 0.0
    %548 = vmatpush2.msra.mxu0 0.0
    %549 = vmatprep.subr.mxu0 0.0
    %550 = vmatpush2.msra.mxu0 0.0
    %551 = vmatprep.subr.mxu0 0.0
    %552 = vmatpush2.msra.mxu0 0.0
    %553 = vmatprep.subr.mxu0 0.0
    %554 = vmatpush2.msra.mxu0 0.0
    %555 = vmatprep.subr.mxu0 0.0
    %556 = vmatpush2.msra.mxu0 0.0
    %557 = vmatprep.subr.mxu0 0.0
    %558 = vmatpush2.msra.mxu0 0.0
    %559 = vmatprep.subr.mxu0 0.0
    %560 = vmatpush2.msra.mxu0 0.0
    %561 = vmatprep.subr.mxu0 0.0
    %562 = vmatpush2.msra.mxu0 0.0
    %563 = vmatprep.subr.mxu0 0.0
    %564 = vmatpush2.msra.mxu0 0.0
    %565 = vmatprep.mubr.f32.mxu0 0.0
    %566 = vmatmul.mubr.f32.gmra.mxu0 %v478
    %v567 = vpop.f32.mrf.mxu0
    %v568 = vadd.f32 0.0, %v567
    %v569 = vpop.f32.mrf.mxu0
    %570 = vmatprep.mubr.f32.mxu0 0.0
    %571 = vmatmul.mubr.f32.gmra.mxu0 %v481
    %v572 = vpop.f32.mrf.mxu0
    %v573 = vadd.f32 0.0, %v572
    %v574 = vpop.f32.mrf.mxu0
    %575 = vmatprep.mubr.f32.mxu0 0.0
    %576 = vmatmul.mubr.f32.gmra.mxu0 %v484
    %v577 = vpop.f32.mrf.mxu0
    %v578 = vadd.f32 0.0, %v577
    %v579 = vpop.f32.mrf.mxu0
    %580 = vmatprep.mubr.f32.mxu0 0.0
    %581 = vmatmul.mubr.f32.gmra.mxu0 %v487
    %v582 = vpop.f32.mrf.mxu0
    %v583 = vadd.f32 0.0, %v582
    %v584 = vpop.f32.mrf.mxu0
    %585 = vmatprep.mubr.f32.mxu0 0.0
    %586 = vmatmul.mubr.f32.gmra.mxu0 %v490
    %v587 = vpop.f32.mrf.mxu0
    %v588 = vadd.f32 0.0, %v587
    %v589 = vpop.f32.mrf.mxu0
    %590 = vmatprep.mubr.f32.mxu0 0.0
    %591 = vmatmul.mubr.f32.gmra.mxu0 %v493
    %v592 = vpop.f32.mrf.mxu0
    %v593 = vadd.f32 0.0, %v592
    %v594 = vpop.f32.mrf.mxu0
    %595 = vmatprep.mubr.f32.mxu0 0.0
    %596 = vmatmul.mubr.f32.gmra.mxu0 %v496
    %v597 = vpop.f32.mrf.mxu0
    %v598 = vadd.f32 0.0, %v597
    %v599 = vpop.f32.mrf.mxu0
    %600 = vmatprep.mubr.f32.mxu0 0.0
    %601 = vmatmul.mubr.f32.gmra.mxu0 %v499
    %v602 = vpop.f32.mrf.mxu0
    %v603 = vadd.f32 0.0, %v602
    %v604 = vpop.f32.mrf.mxu0
    %605 = vdwg.mxu0
    %v606 = vmul.f32 %v568, 2.0
    %v607 = vmul.f32 %v573, 2.0
    %v608 = vmul.f32 %v578, 2.0
    %v609 = vmul.f32 %v583, 2.0
    %v610 = vmul.f32 %v588, 2.0
    %v611 = vmul.f32 %v593, 2.0
    %v612 = vmul.f32 %v598, 2.0
    %v613 = vmul.f32 %v603, 2.0
    %v614 = vsub.f32 %v447, %v606
    %v615 = vsub.f32 %v450, %v607
    %v616 = vsub.f32 %v453, %v608
    %v617 = vsub.f32 %v456, %v609
    %v618 = vsub.f32 %v459, %v610
    %v619 = vsub.f32 %v462, %v611
    %v620 = vsub.f32 %v465, %v612
    %v621 = vsub.f32 %v468, %v613
    %v622 = vlaneseq
    %v623 = vshrl.u32 %v622, 7
    %v624 = vsub.s32 0, %v623
    %v625 = vrot.slane %v37, %v624
    %v626 = vadd.f32 %v614, %v625
    %v627 = vadd.f32 %v615, %v625
    %v628 = vadd.f32 %v616, %v625
    %v629 = vadd.f32 %v617, %v625
    %v630 = vadd.f32 %v618, %v625
    %v631 = vadd.f32 %v619, %v625
    %v632 = vadd.f32 %v620, %v625
    %v633 = vadd.f32 %v621, %v625
    %vm634 = vcmp.ne.f32.partialorder %v626, %v626
    %vm635 = vcmp.ne.f32.partialorder %v627, %v627
    %vm636 = vcmp.ne.f32.partialorder %v628, %v628
    %vm637 = vcmp.ne.f32.partialorder %v629, %v629
    %vm638 = vcmp.ne.f32.partialorder %v630, %v630
    %vm639 = vcmp.ne.f32.partialorder %v631, %v631
    %vm640 = vcmp.ne.f32.partialorder %v632, %v632
    %vm641 = vcmp.ne.f32.partialorder %v633, %v633
    %v642 = vsel %vm634, -inf, %v626
    %v643 = vsel %vm635, -inf, %v627
    %v644 = vsel %vm636, -inf, %v628
    %v645 = vsel %vm637, -inf, %v629
    %v646 = vsel %vm638, -inf, %v630
    %v647 = vsel %vm639, -inf, %v631
    %v648 = vsel %vm640, -inf, %v632
    %v649 = vsel %vm641, -inf, %v633
    %v650 = vsel %vm59, %v642, inf
    %651 = vmin.xlane.f32.xlu0 %v650
    %v652 = vpop.xlane.xlu0 %651
    %v653 = vsel %vm59, %v643, inf
    %654 = vmin.xlane.f32.xlu0 %v653
    %v655 = vpop.xlane.xlu0 %654
    %v656 = vsel %vm59, %v644, inf
    %657 = vmin.xlane.f32.xlu0 %v656
    %v658 = vpop.xlane.xlu0 %657
    %v659 = vsel %vm59, %v645, inf
    %660 = vmin.xlane.f32.xlu0 %v659
    %v661 = vpop.xlane.xlu0 %660
    %v662 = vsel %vm59, %v646, inf
    %663 = vmin.xlane.f32.xlu0 %v662
    %v664 = vpop.xlane.xlu0 %663
    %v665 = vsel %vm59, %v647, inf
    %666 = vmin.xlane.f32.xlu0 %v665
    %v667 = vpop.xlane.xlu0 %666
    %v668 = vsel %vm59, %v648, inf
    %669 = vmin.xlane.f32.xlu0 %v668
    %v670 = vpop.xlane.xlu0 %669
    %v671 = vsel %vm59, %v649, inf
    %672 = vmin.xlane.f32.xlu0 %v671
    %v673 = vpop.xlane.xlu0 %672
    %v674 = vlaneseq
    %v675 = vand.u32 %v674, 127
    %vm676 = vcmp.eq.f32.partialorder %v642, %v652
    %vm677 = vcmp.eq.f32.partialorder %v643, %v655
    %vm678 = vcmp.eq.f32.partialorder %v644, %v658
    %vm679 = vcmp.eq.f32.partialorder %v645, %v661
    %vm680 = vcmp.eq.f32.partialorder %v646, %v664
    %vm681 = vcmp.eq.f32.partialorder %v647, %v667
    %vm682 = vcmp.eq.f32.partialorder %v648, %v670
    %vm683 = vcmp.eq.f32.partialorder %v649, %v673
    %v684 = vsel %vm676, %v675, 32
    %v685 = vsel %vm677, %v675, 32
    %v686 = vsel %vm678, %v675, 32
    %v687 = vsel %vm679, %v675, 32
    %v688 = vsel %vm680, %v675, 32
    %v689 = vsel %vm681, %v675, 32
    %v690 = vsel %vm682, %v675, 32
    %v691 = vsel %vm683, %v675, 32
    %v692 = vsel %vm59, %v684, 2147483647
    %v693 = vand.u32 %v692, 65535
    %v694 = vshra.s32 %v692, 16
    %v695 = vcvt.s32.f32 %v693
    %v696 = vcvt.s32.f32 %v694
    %697 = vmin.xlane.f32.xlu0 %v696
    %v698 = vpop.xlane.xlu0 %697
    %vm699 = vcmp.eq.f32.partialorder %v696, %v698
    %v700 = vsel %vm699, %v695, inf
    %701 = vmin.xlane.f32.xlu0 %v700
    %v702 = vpop.xlane.xlu0 %701
    %v703 = vcvt.f32.s32 %v702
    %v704 = vcvt.f32.s32 %v698
    %v705 = vshll.u32 %v704, 16
    %v706 = vadd.s32 %v705, %v703
    %v707 = vsel %vm59, %v685, 2147483647
    %v708 = vand.u32 %v707, 65535
    %v709 = vshra.s32 %v707, 16
    %v710 = vcvt.s32.f32 %v708
    %v711 = vcvt.s32.f32 %v709
    %712 = vmin.xlane.f32.xlu0 %v711
    %v713 = vpop.xlane.xlu0 %712
    %vm714 = vcmp.eq.f32.partialorder %v711, %v713
    %v715 = vsel %vm714, %v710, inf
    %716 = vmin.xlane.f32.xlu0 %v715
    %v717 = vpop.xlane.xlu0 %716
    %v718 = vcvt.f32.s32 %v717
    %v719 = vcvt.f32.s32 %v713
    %v720 = vshll.u32 %v719, 16
    %v721 = vadd.s32 %v720, %v718
    %v722 = vsel %vm59, %v686, 2147483647
    %v723 = vand.u32 %v722, 65535
    %v724 = vshra.s32 %v722, 16
    %v725 = vcvt.s32.f32 %v723
    %v726 = vcvt.s32.f32 %v724
    %727 = vmin.xlane.f32.xlu0 %v726
    %v728 = vpop.xlane.xlu0 %727
    %vm729 = vcmp.eq.f32.partialorder %v726, %v728
    %v730 = vsel %vm729, %v725, inf
    %731 = vmin.xlane.f32.xlu0 %v730
    %v732 = vpop.xlane.xlu0 %731
    %v733 = vcvt.f32.s32 %v732
    %v734 = vcvt.f32.s32 %v728
    %v735 = vshll.u32 %v734, 16
    %v736 = vadd.s32 %v735, %v733
    %v737 = vsel %vm59, %v687, 2147483647
    %v738 = vand.u32 %v737, 65535
    %v739 = vshra.s32 %v737, 16
    %v740 = vcvt.s32.f32 %v738
    %v741 = vcvt.s32.f32 %v739
    %742 = vmin.xlane.f32.xlu0 %v741
    %v743 = vpop.xlane.xlu0 %742
    %vm744 = vcmp.eq.f32.partialorder %v741, %v743
    %v745 = vsel %vm744, %v740, inf
    %746 = vmin.xlane.f32.xlu0 %v745
    %v747 = vpop.xlane.xlu0 %746
    %v748 = vcvt.f32.s32 %v747
    %v749 = vcvt.f32.s32 %v743
    %v750 = vshll.u32 %v749, 16
    %v751 = vadd.s32 %v750, %v748
    %v752 = vsel %vm59, %v688, 2147483647
    %v753 = vand.u32 %v752, 65535
    %v754 = vshra.s32 %v752, 16
    %v755 = vcvt.s32.f32 %v753
    %v756 = vcvt.s32.f32 %v754
    %757 = vmin.xlane.f32.xlu0 %v756
    %v758 = vpop.xlane.xlu0 %757
    %vm759 = vcmp.eq.f32.partialorder %v756, %v758
    %v760 = vsel %vm759, %v755, inf
    %761 = vmin.xlane.f32.xlu0 %v760
    %v762 = vpop.xlane.xlu0 %761
    %v763 = vcvt.f32.s32 %v762
    %v764 = vcvt.f32.s32 %v758
    %v765 = vshll.u32 %v764, 16
    %v766 = vadd.s32 %v765, %v763
    %v767 = vsel %vm59, %v689, 2147483647
    %v768 = vand.u32 %v767, 65535
    %v769 = vshra.s32 %v767, 16
    %v770 = vcvt.s32.f32 %v768
    %v771 = vcvt.s32.f32 %v769
    %772 = vmin.xlane.f32.xlu0 %v771
    %v773 = vpop.xlane.xlu0 %772
    %vm774 = vcmp.eq.f32.partialorder %v771, %v773
    %v775 = vsel %vm774, %v770, inf
    %776 = vmin.xlane.f32.xlu0 %v775
    %v777 = vpop.xlane.xlu0 %776
    %v778 = vcvt.f32.s32 %v777
    %v779 = vcvt.f32.s32 %v773
    %v780 = vshll.u32 %v779, 16
    %v781 = vadd.s32 %v780, %v778
    %v782 = vsel %vm59, %v690, 2147483647
    %v783 = vand.u32 %v782, 65535
    %v784 = vshra.s32 %v782, 16
    %v785 = vcvt.s32.f32 %v783
    %v786 = vcvt.s32.f32 %v784
    %787 = vmin.xlane.f32.xlu0 %v786
    %v788 = vpop.xlane.xlu0 %787
    %vm789 = vcmp.eq.f32.partialorder %v786, %v788
    %v790 = vsel %vm789, %v785, inf
    %791 = vmin.xlane.f32.xlu0 %v790
    %v792 = vpop.xlane.xlu0 %791
    %v793 = vcvt.f32.s32 %v792
    %v794 = vcvt.f32.s32 %v788
    %v795 = vshll.u32 %v794, 16
    %v796 = vadd.s32 %v795, %v793
    %v797 = vsel %vm59, %v691, 2147483647
    %v798 = vand.u32 %v797, 65535
    %v799 = vshra.s32 %v797, 16
    %v800 = vcvt.s32.f32 %v798
    %v801 = vcvt.s32.f32 %v799
    %802 = vmin.xlane.f32.xlu0 %v801
    %v803 = vpop.xlane.xlu0 %802
    %vm804 = vcmp.eq.f32.partialorder %v801, %v803
    %v805 = vsel %vm804, %v800, inf
    %806 = vmin.xlane.f32.xlu0 %v805
    %v807 = vpop.xlane.xlu0 %806
    %v808 = vcvt.f32.s32 %v807
    %v809 = vcvt.f32.s32 %v803
    %v810 = vshll.u32 %v809, 16
    %v811 = vadd.s32 %v810, %v808
    %vm812 = vcmp.eq.s32.totalorder %v675, %v706
    %vm813 = vcmp.eq.s32.totalorder %v675, %v721
    %vm814 = vcmp.eq.s32.totalorder %v675, %v736
    %vm815 = vcmp.eq.s32.totalorder %v675, %v751
    %vm816 = vcmp.eq.s32.totalorder %v675, %v766
    %vm817 = vcmp.eq.s32.totalorder %v675, %v781
    %vm818 = vcmp.eq.s32.totalorder %v675, %v796
    %vm819 = vcmp.eq.s32.totalorder %v675, %v811
    %v820 = vsel %vm812, 1, 0
    %v821 = vsel %vm813, 1, 0
    %v822 = vsel %vm814, 1, 0
    %v823 = vsel %vm815, 1, 0
    %v824 = vsel %vm816, 1, 0
    %v825 = vsel %vm817, 1, 0
    %v826 = vsel %vm818, 1, 0
    %v827 = vsel %vm819, 1, 0
    %v828 = vcvt.s32.f32 %v820
    %v829 = vcvt.s32.f32 %v821
    %v830 = vcvt.s32.f32 %v822
    %v831 = vcvt.s32.f32 %v823
    %v832 = vcvt.s32.f32 %v824
    %v833 = vcvt.s32.f32 %v825
    %v834 = vcvt.s32.f32 %v826
    %v835 = vcvt.s32.f32 %v827
    %v836 = vmul.f32 %v828, %v469
    %v837 = vmul.f32 %v829, %v470
    %v838 = vmul.f32 %v830, %v471
    %v839 = vmul.f32 %v831, %v472
    %v840 = vmul.f32 %v832, %v473
    %v841 = vmul.f32 %v833, %v474
    %v842 = vmul.f32 %v834, %v475
    %v843 = vmul.f32 %v835, %v476
    %v844 = vsel %vm59, %v836, 0.0
    %845 = vadd.xlane.f32.xlu0 %v844
    %v846 = vpop.xlane.xlu0 %845
    %v847 = vsel %vm59, %v837, 0.0
    %848 = vadd.xlane.f32.xlu0 %v847
    %v849 = vpop.xlane.xlu0 %848
    %v850 = vsel %vm59, %v838, 0.0
    %851 = vadd.xlane.f32.xlu0 %v850
    %v852 = vpop.xlane.xlu0 %851
    %v853 = vsel %vm59, %v839, 0.0
    %854 = vadd.xlane.f32.xlu0 %v853
    %v855 = vpop.xlane.xlu0 %854
    %v856 = vsel %vm59, %v840, 0.0
    %857 = vadd.xlane.f32.xlu0 %v856
    %v858 = vpop.xlane.xlu0 %857
    %v859 = vsel %vm59, %v841, 0.0
    %860 = vadd.xlane.f32.xlu0 %v859
    %v861 = vpop.xlane.xlu0 %860
    %v862 = vsel %vm59, %v842, 0.0
    %863 = vadd.xlane.f32.xlu0 %v862
    %v864 = vpop.xlane.xlu0 %863
    %v865 = vsel %vm59, %v843, 0.0
    %866 = vadd.xlane.f32.xlu0 %v865
    %v867 = vpop.xlane.xlu0 %866
    %v868 = vlaneseq
    %v869 = vshrl.u32 %v868, 7
    %v870 = vsub.s32 0, %v869
    %v871 = vrot.slane %v226, %v870
    %873 = vbcast.lane.b32.xlu0 %v871, 256
    %v874 = vpop.permute.xlu0 %873
    %v875 = vlaneseq
    %v876 = vshrl.u32 %v875, 7
    %v877 = vsub.s32 1, %v876
    %v878 = vrot.slane %v226, %v877
    %880 = vbcast.lane.b32.xlu0 %v878, 256
    %v881 = vpop.permute.xlu0 %880
    %v882 = vlaneseq
    %v883 = vshrl.u32 %v882, 7
    %v884 = vsub.s32 2, %v883
    %v885 = vrot.slane %v226, %v884
    %887 = vbcast.lane.b32.xlu0 %v885, 256
    %v888 = vpop.permute.xlu0 %887
    %v889 = vlaneseq
    %v890 = vshrl.u32 %v889, 7
    %v891 = vsub.s32 3, %v890
    %v892 = vrot.slane %v226, %v891
    %894 = vbcast.lane.b32.xlu0 %v892, 256
    %v895 = vpop.permute.xlu0 %894
    %v896 = vlaneseq
    %v897 = vshrl.u32 %v896, 7
    %v898 = vsub.s32 4, %v897
    %v899 = vrot.slane %v226, %v898
    %901 = vbcast.lane.b32.xlu0 %v899, 256
    %v902 = vpop.permute.xlu0 %901
    %v903 = vlaneseq
    %v904 = vshrl.u32 %v903, 7
    %v905 = vsub.s32 5, %v904
    %v906 = vrot.slane %v226, %v905
    %908 = vbcast.lane.b32.xlu0 %v906, 256
    %v909 = vpop.permute.xlu0 %908
    %v910 = vlaneseq
    %v911 = vshrl.u32 %v910, 7
    %v912 = vsub.s32 6, %v911
    %v913 = vrot.slane %v226, %v912
    %915 = vbcast.lane.b32.xlu0 %v913, 256
    %v916 = vpop.permute.xlu0 %915
    %v917 = vlaneseq
    %v918 = vshrl.u32 %v917, 7
    %v919 = vsub.s32 7, %v918
    %v920 = vrot.slane %v226, %v919
    %922 = vbcast.lane.b32.xlu0 %v920, 256
    %v923 = vpop.permute.xlu0 %922
    %v932 = vsub.f32 %v846, %v874
    %v933 = vsub.f32 %v849, %v881
    %v934 = vsub.f32 %v852, %v888
    %v935 = vsub.f32 %v855, %v895
    %v936 = vsub.f32 %v858, %v902
    %v937 = vsub.f32 %v861, %v909
    %v938 = vsub.f32 %v864, %v916
    %v939 = vsub.f32 %v867, %v923
    %v940 = vmul.f32 %v932, %v932
    %v941 = vmul.f32 %v933, %v933
    %v942 = vmul.f32 %v934, %v934
    %v943 = vmul.f32 %v935, %v935
    %v944 = vmul.f32 %v936, %v936
    %v945 = vmul.f32 %v937, %v937
    %v946 = vmul.f32 %v938, %v938
    %v947 = vmul.f32 %v939, %v939
    %956 = vset.pattern.permute.xlu0 0
    %957 = vperm.xlu0 %956, %v940
    %v958 = vpop.permute.xlu0 %957
    %959 = vset.pattern.permute.xlu0 0
    %960 = vperm.xlu0 %959, %v941
    %v961 = vpop.permute.xlu0 %960
    %962 = vset.pattern.permute.xlu0 0
    %963 = vperm.xlu0 %962, %v942
    %v964 = vpop.permute.xlu0 %963
    %965 = vset.pattern.permute.xlu0 0
    %966 = vperm.xlu0 %965, %v943
    %v967 = vpop.permute.xlu0 %966
    %968 = vset.pattern.permute.xlu0 0
    %969 = vperm.xlu0 %968, %v944
    %v970 = vpop.permute.xlu0 %969
    %971 = vset.pattern.permute.xlu0 0
    %972 = vperm.xlu0 %971, %v945
    %v973 = vpop.permute.xlu0 %972
    %974 = vset.pattern.permute.xlu0 0
    %975 = vperm.xlu0 %974, %v946
    %v976 = vpop.permute.xlu0 %975
    %977 = vset.pattern.permute.xlu0 0
    %978 = vperm.xlu0 %977, %v947
    %v979 = vpop.permute.xlu0 %978
    %v980 = vlaneseq
    %v981 = vshrl.u32 %v980, 7
    %v982 = vsub.s32 %v675, %v981
    %v983 = vrot.slane %v958, %v982
    %v984 = vlaneseq
    %v985 = vshrl.u32 %v984, 7
    %v986 = vsub.s32 %v675, %v985
    %v987 = vrot.slane %v961, %v986
    %v988 = vlaneseq
    %v989 = vshrl.u32 %v988, 7
    %v990 = vsub.s32 %v675, %v989
    %v991 = vrot.slane %v964, %v990
    %v992 = vlaneseq
    %v993 = vshrl.u32 %v992, 7
    %v994 = vsub.s32 %v675, %v993
    %v995 = vrot.slane %v967, %v994
    %v996 = vlaneseq
    %v997 = vshrl.u32 %v996, 7
    %v998 = vsub.s32 %v675, %v997
    %v999 = vrot.slane %v970, %v998
    %v1000 = vlaneseq
    %v1001 = vshrl.u32 %v1000, 7
    %v1002 = vsub.s32 %v675, %v1001
    %v1003 = vrot.slane %v973, %v1002
    %v1004 = vlaneseq
    %v1005 = vshrl.u32 %v1004, 7
    %v1006 = vsub.s32 %v675, %v1005
    %v1007 = vrot.slane %v976, %v1006
    %v1008 = vlaneseq
    %v1009 = vshrl.u32 %v1008, 7
    %v1010 = vsub.s32 %v675, %v1009
    %v1011 = vrot.slane %v979, %v1010
    %vm1012 = vcmask 1041409
    %v1013 = vsel %vm1012, %v987, %v983
    %vm1014 = vcmask 1042434
    %v1015 = vsel %vm1014, %v991, %v1013
    %vm1016 = vcmask 1043459
    %v1017 = vsel %vm1016, %v995, %v1015
    %vm1018 = vcmask 1044484
    %v1019 = vsel %vm1018, %v999, %v1017
    %vm1020 = vcmask 1045509
    %v1021 = vsel %vm1020, %v1003, %v1019
    %vm1022 = vcmask 1046534
    %v1023 = vsel %vm1022, %v1007, %v1021
    %vm1024 = vcmask 1047559
    %v1025 = vsel %vm1024, %v1011, %v1023
    %v1027 = vsel %vm205, %v1025, 0.0
    %1028 = vadd.xlane.f32.xlu0 %v1027
    %v1029 = vpop.xlane.xlu0 %1028
    %v1030 = vrot.slane %v1029, 4
    %v1031 = vadd.f32 %v1029, %v1030
    %v1032 = vrot.slane %v1031, 2
    %v1033 = vadd.f32 %v1031, %v1032
    %v1034 = vrot.slane %v1033, 1
    %v1035 = vadd.f32 %v1033, %v1034
    %s1036 = vtos %v1035
    %v1037 = vstv %s1036
    %v1038 = vrcp.pop 64.0
    %v1039 = vmul.f32 %v1037, %v1038
    %v1040 = vmul.f32 %v1039, 1.25
    %v1041 = vld [vmem:[%s3 + $0x8] sm:$0xff]
    %v1043 = vsel %vm141, %v1041, 0
    %1045 = vmatprep.subr.mxu0 0.0
    %1046 = vmatpush1.msra.mxu0 0.0
    %1047 = vmatprep.subr.mxu0 0.0
    %1048 = vmatpush1.msra.mxu0 0.0
    %1049 = vmatprep.subr.mxu0 0.0
    %1050 = vmatpush1.msra.mxu0 0.0
    %1051 = vmatprep.subr.mxu0 0.0
    %1052 = vmatpush1.msra.mxu0 0.0
    %1053 = vmatprep.subr.mxu0 0.0
    %1054 = vmatpush1.msra.mxu0 0.0
    %1055 = vmatprep.subr.mxu0 0.0
    %1056 = vmatpush1.msra.mxu0 0.0
    %1057 = vmatprep.subr.mxu0 0.0
    %1058 = vmatpush1.msra.mxu0 0.0
    %1059 = vmatprep.subr.mxu0 0.0
    %1060 = vmatpush1.msra.mxu0 0.0
    %1061 = vmatprep.subr.mxu0 0.0
    %1062 = vmatpush1.msra.mxu0 %v835
    %1063 = vmatprep.subr.mxu0 0.0
    %1064 = vmatpush1.msra.mxu0 %v834
    %1065 = vmatprep.subr.mxu0 0.0
    %1066 = vmatpush1.msra.mxu0 %v833
    %1067 = vmatprep.subr.mxu0 0.0
    %1068 = vmatpush1.msra.mxu0 %v832
    %1069 = vmatprep.subr.mxu0 0.0
    %1070 = vmatpush1.msra.mxu0 %v831
    %1071 = vmatprep.subr.mxu0 0.0
    %1072 = vmatpush1.msra.mxu0 %v830
    %1073 = vmatprep.subr.mxu0 0.0
    %1074 = vmatpush1.msra.mxu0 %v829
    %1075 = vmatprep.subr.mxu0 0.0
    %1076 = vmatpush1.msra.mxu0 %v828
    %1077 = vmatprep.subr.mxu0 0.0
    %1078 = vmatpush2.msra.mxu0 0.0
    %1079 = vmatprep.subr.mxu0 0.0
    %1080 = vmatpush2.msra.mxu0 0.0
    %1081 = vmatprep.subr.mxu0 0.0
    %1082 = vmatpush2.msra.mxu0 0.0
    %1083 = vmatprep.subr.mxu0 0.0
    %1084 = vmatpush2.msra.mxu0 0.0
    %1085 = vmatprep.subr.mxu0 0.0
    %1086 = vmatpush2.msra.mxu0 0.0
    %1087 = vmatprep.subr.mxu0 0.0
    %1088 = vmatpush2.msra.mxu0 0.0
    %1089 = vmatprep.subr.mxu0 0.0
    %1090 = vmatpush2.msra.mxu0 0.0
    %1091 = vmatprep.subr.mxu0 0.0
    %1092 = vmatpush2.msra.mxu0 0.0
    %1093 = vmatprep.subr.mxu0 0.0
    %1094 = vmatpush2.msra.mxu0 0.0
    %1095 = vmatprep.subr.mxu0 0.0
    %1096 = vmatpush2.msra.mxu0 0.0
    %1097 = vmatprep.subr.mxu0 0.0
    %1098 = vmatpush2.msra.mxu0 0.0
    %1099 = vmatprep.subr.mxu0 0.0
    %1100 = vmatpush2.msra.mxu0 0.0
    %1101 = vmatprep.subr.mxu0 0.0
    %1102 = vmatpush2.msra.mxu0 0.0
    %1103 = vmatprep.subr.mxu0 0.0
    %1104 = vmatpush2.msra.mxu0 0.0
    %1105 = vmatprep.subr.mxu0 0.0
    %1106 = vmatpush2.msra.mxu0 0.0
    %1107 = vmatprep.subr.mxu0 0.0
    %1108 = vmatpush2.msra.mxu0 0.0
    %1109 = vmatprep.mubr.f32.mxu0 0.0
    %1110 = vmatmul.mubr.f32.gmra.mxu0 %v1043
    %v1111 = vpop.f32.mrf.mxu0
    %v1112 = vadd.f32 0.0, %v1111
    %v1113 = vpop.f32.mrf.mxu0
    %1114 = vdwg.mxu0
    %v1115 = vadd.f32 %v1112, 1e-10
    %v1116 = vlog2.pop %v1115
    %v1117 = vmul.f32 %v1116, 0.6931472
    %v1118 = vmul.f32 %v1112, %v1117
    %v1119 = vsel %vm59, %v1118, 0.0
    %1120 = vadd.xlane.f32.xlu0 %v1119
    %v1121 = vpop.xlane.xlu0 %1120
    %v1122 = vrot.slane %v1121, 4
    %v1123 = vadd.f32 %v1121, %v1122
    %v1124 = vrot.slane %v1123, 2
    %v1125 = vadd.f32 %v1123, %v1124
    %v1126 = vrot.slane %v1125, 1
    %v1127 = vadd.f32 %v1125, %v1126
    %s1128 = vtos %v1127
    %v1129 = vstv %s1128
    %v1130 = vsub.f32 0.0, %v1129
    %v1131 = vmul.f32 %v1130, 1.442695
    %v1132 = vpow.pop %v1131
    %v1141 = vlaneseq
    %v1142 = vshrl.u32 %v1141, 7
    %v1143 = vsub.s32 %v675, %v1142
    %v1144 = vrot.slane %v846, %v1143
    %v1145 = vlaneseq
    %v1146 = vshrl.u32 %v1145, 7
    %v1147 = vsub.s32 %v675, %v1146
    %v1148 = vrot.slane %v849, %v1147
    %v1149 = vlaneseq
    %v1150 = vshrl.u32 %v1149, 7
    %v1151 = vsub.s32 %v675, %v1150
    %v1152 = vrot.slane %v852, %v1151
    %v1153 = vlaneseq
    %v1154 = vshrl.u32 %v1153, 7
    %v1155 = vsub.s32 %v675, %v1154
    %v1156 = vrot.slane %v855, %v1155
    %v1157 = vlaneseq
    %v1158 = vshrl.u32 %v1157, 7
    %v1159 = vsub.s32 %v675, %v1158
    %v1160 = vrot.slane %v858, %v1159
    %v1161 = vlaneseq
    %v1162 = vshrl.u32 %v1161, 7
    %v1163 = vsub.s32 %v675, %v1162
    %v1164 = vrot.slane %v861, %v1163
    %v1165 = vlaneseq
    %v1166 = vshrl.u32 %v1165, 7
    %v1167 = vsub.s32 %v675, %v1166
    %v1168 = vrot.slane %v864, %v1167
    %v1169 = vlaneseq
    %v1170 = vshrl.u32 %v1169, 7
    %v1171 = vsub.s32 %v675, %v1170
    %v1172 = vrot.slane %v867, %v1171
    %v1173 = vsel %vm1012, %v1148, %v1144
    %v1174 = vsel %vm1014, %v1152, %v1173
    %v1175 = vsel %vm1016, %v1156, %v1174
    %v1176 = vsel %vm1018, %v1160, %v1175
    %v1177 = vsel %vm1020, %v1164, %v1176
    %v1178 = vsel %vm1022, %v1168, %v1177
    %v1179 = vsel %vm1024, %v1172, %v1178
    %1181 = vrot.lane.b32.xlu0 %v30, 88
    %v1182 = vpop.permute.xlu0 %1181
    %v1184 = vsel %vm205, %v1179, %v1182
    %v1185 = vpack.c.bf16 %v1184, %v1184
    %v1186 = vld [vmem:[%s1 + $0x30] sm:$0xf]
    %v1187 = vld [vmem:[%s1 + $0x34] sm:$0xf]
    %v1188 = vlaneseq
    %v1189 = vshrl.u32 %v1188, 7
    %v1190 = vsub.s32 0, %v1189
    %v1191 = vrot.slane %v33, %v1190
    %v1194 = vunpack.c.l.b16 %v1186
    %v1195 = vunpack.c.l.b16 %v1187
    %v1196 = vpack.c.b16 %v1195, %v1194
    %vm1198 = vcmask 130048
    %v1200 = vsel %vm1198, %v1185, 0
    %1202 = vmatprep.subr.bf16.mxu0 0
    %1203 = vmatpush1.bf16.msra.mxu0 0
    %1204 = vmatprep.subr.bf16.mxu0 0
    %1205 = vmatpush1.bf16.msra.mxu0 0
    %1206 = vmatprep.subr.bf16.mxu0 0
    %1207 = vmatpush1.bf16.msra.mxu0 0
    %1208 = vmatprep.subr.bf16.mxu0 0
    %1209 = vmatpush1.bf16.msra.mxu0 0
    %1210 = vmatprep.subr.bf16.mxu0 0
    %1211 = vmatpush1.bf16.msra.mxu0 0
    %1212 = vmatprep.subr.bf16.mxu0 0
    %1213 = vmatpush1.bf16.msra.mxu0 0
    %1214 = vmatprep.subr.bf16.mxu0 0
    %1215 = vmatpush1.bf16.msra.mxu0 0
    %1216 = vmatprep.subr.bf16.mxu0 0
    %1217 = vmatpush1.bf16.msra.mxu0 %v1196
    %1218 = vmatprep.subr.bf16.mxu0 0
    %1219 = vmatpush2.bf16.msra.mxu0 0
    %1220 = vmatprep.subr.bf16.mxu0 0
    %1221 = vmatpush2.bf16.msra.mxu0 0
    %1222 = vmatprep.subr.bf16.mxu0 0
    %1223 = vmatpush2.bf16.msra.mxu0 0
    %1224 = vmatprep.subr.bf16.mxu0 0
    %1225 = vmatpush2.bf16.msra.mxu0 0
    %1226 = vmatprep.subr.bf16.mxu0 0
    %1227 = vmatpush2.bf16.msra.mxu0 0
    %1228 = vmatprep.subr.bf16.mxu0 0
    %1229 = vmatpush2.bf16.msra.mxu0 0
    %1230 = vmatprep.subr.bf16.mxu0 0
    %1231 = vmatpush2.bf16.msra.mxu0 0
    %1232 = vmatprep.subr.bf16.mxu0 0
    %1233 = vmatpush2.bf16.msra.mxu0 0
    %1234 = vmatprep.mubr.bf16.mxu0 0
    %1235 = vmatmul.mubr.bf16.gmra.mxu0 %v1200
    %v1236 = vpop.f32.mrf.mxu0
    %v1237 = vadd.f32 %v1191, %v1236
    %v1238 = vpop.f32.mrf.mxu0
    %v1239 = vpop.f32.mrf.mxu0
    %v1240 = vpop.f32.mrf.mxu0
    %1241 = vdwg.mxu0
    %v1242 = vmax.f32 %v1237, 0.0
    %v1243 = vpack.c.bf16 %v1242, %v1242
    %v1244 = vld [vmem:[%s1 + $0x38] sm:$0xf]
    %v1245 = vld [vmem:[%s1 + $0x3c] sm:$0x3]
    %v1246 = vlaneseq
    %v1247 = vshrl.u32 %v1246, 7
    %v1248 = vsub.s32 0, %v1247
    %v1249 = vrot.slane %v34, %v1248
    %v1252 = vunpack.c.l.b16 %v1244
    %v1253 = vunpack.c.l.b16 %v1245
    %v1254 = vpack.c.b16 %v1253, %v1252
    %vm1255 = vcmask 97280
    %v1257 = vsel %vm1255, %v1243, 0
    %vm1259 = vcmask 1045504
    %v1261 = vsel %vm1259, %v1254, 0
    %1263 = vmatprep.subr.bf16.mxu0 0
    %1264 = vmatpush1.bf16.msra.mxu0 0
    %1265 = vmatprep.subr.bf16.mxu0 0
    %1266 = vmatpush1.bf16.msra.mxu0 0
    %1267 = vmatprep.subr.bf16.mxu0 0
    %1268 = vmatpush1.bf16.msra.mxu0 0
    %1269 = vmatprep.subr.bf16.mxu0 0
    %1270 = vmatpush1.bf16.msra.mxu0 0
    %1271 = vmatprep.subr.bf16.mxu0 0
    %1272 = vmatpush1.bf16.msra.mxu0 0
    %1273 = vmatprep.subr.bf16.mxu0 0
    %1274 = vmatpush1.bf16.msra.mxu0 0
    %1275 = vmatprep.subr.bf16.mxu0 0
    %1276 = vmatpush1.bf16.msra.mxu0 0
    %1277 = vmatprep.subr.bf16.mxu0 0
    %1278 = vmatpush1.bf16.msra.mxu0 %v1261
    %1279 = vmatprep.subr.bf16.mxu0 0
    %1280 = vmatpush2.bf16.msra.mxu0 0
    %1281 = vmatprep.subr.bf16.mxu0 0
    %1282 = vmatpush2.bf16.msra.mxu0 0
    %1283 = vmatprep.subr.bf16.mxu0 0
    %1284 = vmatpush2.bf16.msra.mxu0 0
    %1285 = vmatprep.subr.bf16.mxu0 0
    %1286 = vmatpush2.bf16.msra.mxu0 0
    %1287 = vmatprep.subr.bf16.mxu0 0
    %1288 = vmatpush2.bf16.msra.mxu0 0
    %1289 = vmatprep.subr.bf16.mxu0 0
    %1290 = vmatpush2.bf16.msra.mxu0 0
    %1291 = vmatprep.subr.bf16.mxu0 0
    %1292 = vmatpush2.bf16.msra.mxu0 0
    %1293 = vmatprep.subr.bf16.mxu0 0
    %1294 = vmatpush2.bf16.msra.mxu0 0
    %1295 = vmatprep.mubr.bf16.mxu0 0
    %1296 = vmatmul.mubr.bf16.gmra.mxu0 %v1257
    %v1297 = vpop.f32.mrf.mxu0
    %v1298 = vadd.f32 %v1249, %v1297
    %v1299 = vpop.f32.mrf.mxu0
    %v1300 = vpop.f32.mrf.mxu0
    %v1301 = vpop.f32.mrf.mxu0
    %1302 = vdwg.mxu0
    %v1303 = vsub.f32 %v1298, %v30
    %v1304 = vmul.f32 %v1303, %v1303
    %v1305 = vsel %vm1198, %v1304, 0.0
    %1306 = vadd.xlane.f32.xlu0 %v1305
    %v1307 = vpop.xlane.xlu0 %1306
    %v1308 = vrot.slane %v1307, 4
    %v1309 = vadd.f32 %v1307, %v1308
    %v1310 = vrot.slane %v1309, 2
    %v1311 = vadd.f32 %v1309, %v1310
    %v1312 = vrot.slane %v1311, 1
    %v1313 = vadd.f32 %v1311, %v1312
    %s1314 = vtos %v1313
    %v1315 = vstv %s1314
    %v1316 = vrcp.pop 8.0
    %v1317 = vmul.f32 %v1315, %v1316
    %vm1318 = vcmask 7168
    %v1319 = vsel %vm1318, %v216, %v1040
    %vm1320 = vcmask 15360
    %v1321 = vsel %vm1320, %v1319, %v1132
    %vm1322 = vcmask 23552
    %v1323 = vsel %vm1322, %v1321, %v1317
    %vm1324 = vcmask 24576
    %1325 = vst.msk [vmem:[%s8] sm:$0x1] %vm1324, %v1323
    %s1327 = sor.u32 256, 8
    %1328 = vbcast.lane.b32.xlu0 %v230, %s1327
    %v1329 = vpop.permute.xlu0 %1328
    %s1331 = sor.u32 256, 8
    %1332 = vbcast.lane.b32.xlu0 %v237, %s1331
    %v1333 = vpop.permute.xlu0 %1332
    %s1335 = sor.u32 256, 8
    %1336 = vbcast.lane.b32.xlu0 %v244, %s1335
    %v1337 = vpop.permute.xlu0 %1336
    %s1339 = sor.u32 256, 8
    %1340 = vbcast.lane.b32.xlu0 %v251, %s1339
    %v1341 = vpop.permute.xlu0 %1340
    %s1343 = sor.u32 256, 8
    %1344 = vbcast.lane.b32.xlu0 %v258, %s1343
    %v1345 = vpop.permute.xlu0 %1344
    %s1347 = sor.u32 256, 8
    %1348 = vbcast.lane.b32.xlu0 %v265, %s1347
    %v1349 = vpop.permute.xlu0 %1348
    %s1351 = sor.u32 256, 8
    %1352 = vbcast.lane.b32.xlu0 %v272, %s1351
    %v1353 = vpop.permute.xlu0 %1352
    %s1355 = sor.u32 256, 8
    %1356 = vbcast.lane.b32.xlu0 %v279, %s1355
    %v1357 = vpop.permute.xlu0 %1356
    %v1358 = vmul.f32 %v1329, %v336
    %v1359 = vmul.f32 %v1333, %v340
    %v1360 = vmul.f32 %v1337, %v344
    %v1361 = vmul.f32 %v1341, %v348
    %v1362 = vmul.f32 %v1345, %v352
    %v1363 = vmul.f32 %v1349, %v356
    %v1364 = vmul.f32 %v1353, %v360
    %v1365 = vmul.f32 %v1357, %v364
    %v1366 = vpack.c.bf16 %v1359, %v1358
    %v1367 = vpack.c.bf16 %v1361, %v1360
    %v1368 = vpack.c.bf16 %v1363, %v1362
    %v1369 = vpack.c.bf16 %v1365, %v1364
    %v1370 = vld [vmem:[%s1 + $0x40] sm:$0xf]
    %v1371 = vlaneseq
    %v1372 = vshrl.u32 %v1371, 7
    %v1373 = vsub.s32 0, %v1372
    %v1374 = vrot.slane %v35, %v1373
    %1379 = vrot.lane.b32.xlu0 %v1366, 120
    %v1380 = vpop.permute.xlu0 %1379
    %1381 = vrot.lane.b32.xlu0 %v1367, 120
    %v1382 = vpop.permute.xlu0 %1381
    %1383 = vrot.lane.b32.xlu0 %v1368, 120
    %v1384 = vpop.permute.xlu0 %1383
    %1385 = vrot.lane.b32.xlu0 %v1369, 120
    %v1386 = vpop.permute.xlu0 %1385
    %v1388 = vsel %vm205, %v1380, 0
    %v1391 = vsel %vm205, %v1382, 0
    %v1394 = vsel %vm205, %v1384, 0
    %v1397 = vsel %vm205, %v1386, 0
    %vm1399 = vcmask 1043456
    %v1401 = vsel %vm1399, %v1370, 0
    %1403 = vmatprep.subr.bf16.mxu0 0
    %1404 = vmatpush1.bf16.msra.mxu0 0
    %1405 = vmatprep.subr.bf16.mxu0 0
    %1406 = vmatpush1.bf16.msra.mxu0 0
    %1407 = vmatprep.subr.bf16.mxu0 0
    %1408 = vmatpush1.bf16.msra.mxu0 0
    %1409 = vmatprep.subr.bf16.mxu0 0
    %1410 = vmatpush1.bf16.msra.mxu0 0
    %1411 = vmatprep.subr.bf16.mxu0 0
    %1412 = vmatpush1.bf16.msra.mxu0 0
    %1413 = vmatprep.subr.bf16.mxu0 0
    %1414 = vmatpush1.bf16.msra.mxu0 0
    %1415 = vmatprep.subr.bf16.mxu0 0
    %1416 = vmatpush1.bf16.msra.mxu0 0
    %1417 = vmatprep.subr.bf16.mxu0 0
    %1418 = vmatpush1.bf16.msra.mxu0 %v1401
    %1419 = vmatprep.subr.bf16.mxu0 0
    %1420 = vmatpush2.bf16.msra.mxu0 0
    %1421 = vmatprep.subr.bf16.mxu0 0
    %1422 = vmatpush2.bf16.msra.mxu0 0
    %1423 = vmatprep.subr.bf16.mxu0 0
    %1424 = vmatpush2.bf16.msra.mxu0 0
    %1425 = vmatprep.subr.bf16.mxu0 0
    %1426 = vmatpush2.bf16.msra.mxu0 0
    %1427 = vmatprep.subr.bf16.mxu0 0
    %1428 = vmatpush2.bf16.msra.mxu0 0
    %1429 = vmatprep.subr.bf16.mxu0 0
    %1430 = vmatpush2.bf16.msra.mxu0 0
    %1431 = vmatprep.subr.bf16.mxu0 0
    %1432 = vmatpush2.bf16.msra.mxu0 0
    %1433 = vmatprep.subr.bf16.mxu0 0
    %1434 = vmatpush2.bf16.msra.mxu0 0
    %1435 = vmatprep.mubr.bf16.mxu0 0
    %1436 = vmatmul.mubr.bf16.gmra.mxu0 %v1388
    %v1437 = vpop.f32.mrf.mxu0
    %v1438 = vadd.f32 %v1374, %v1437
    %v1439 = vpop.f32.mrf.mxu0
    %v1440 = vpop.f32.mrf.mxu0
    %v1441 = vadd.f32 %v1374, %v1440
    %v1442 = vpop.f32.mrf.mxu0
    %1443 = vmatprep.mubr.bf16.mxu0 0
    %1444 = vmatmul.mubr.bf16.gmra.mxu0 %v1391
    %v1445 = vpop.f32.mrf.mxu0
    %v1446 = vadd.f32 %v1374, %v1445
    %v1447 = vpop.f32.mrf.mxu0
    %v1448 = vpop.f32.mrf.mxu0
    %v1449 = vadd.f32 %v1374, %v1448
    %v1450 = vpop.f32.mrf.mxu0
    %1451 = vmatprep.mubr.bf16.mxu0 0
    %1452 = vmatmul.mubr.bf16.gmra.mxu0 %v1394
    %v1453 = vpop.f32.mrf.mxu0
    %v1454 = vadd.f32 %v1374, %v1453
    %v1455 = vpop.f32.mrf.mxu0
    %v1456 = vpop.f32.mrf.mxu0
    %v1457 = vadd.f32 %v1374, %v1456
    %v1458 = vpop.f32.mrf.mxu0
    %1459 = vmatprep.mubr.bf16.mxu0 0
    %1460 = vmatmul.mubr.bf16.gmra.mxu0 %v1397
    %v1461 = vpop.f32.mrf.mxu0
    %v1462 = vadd.f32 %v1374, %v1461
    %v1463 = vpop.f32.mrf.mxu0
    %v1464 = vpop.f32.mrf.mxu0
    %v1465 = vadd.f32 %v1374, %v1464
    %v1466 = vpop.f32.mrf.mxu0
    %1467 = vdwg.mxu0
    %v1468 = vld [vmem:[%s5] sm:$0xff]
    %v1470 = vsel %vm205, %v1438, 0
    %v1473 = vsel %vm205, %v1441, 0
    %v1476 = vsel %vm205, %v1446, 0
    %v1479 = vsel %vm205, %v1449, 0
    %v1482 = vsel %vm205, %v1454, 0
    %v1485 = vsel %vm205, %v1457, 0
    %v1488 = vsel %vm205, %v1462, 0
    %v1491 = vsel %vm205, %v1465, 0
    %1493 = vmatprep.subr.mxu0 0.0
    %1494 = vmatpush1.msra.mxu0 0.0
    %1495 = vmatprep.subr.mxu0 0.0
    %1496 = vmatpush1.msra.mxu0 0.0
    %1497 = vmatprep.subr.mxu0 0.0
    %1498 = vmatpush1.msra.mxu0 0.0
    %1499 = vmatprep.subr.mxu0 0.0
    %1500 = vmatpush1.msra.mxu0 0.0
    %1501 = vmatprep.subr.mxu0 0.0
    %1502 = vmatpush1.msra.mxu0 0.0
    %1503 = vmatprep.subr.mxu0 0.0
    %1504 = vmatpush1.msra.mxu0 0.0
    %1505 = vmatprep.subr.mxu0 0.0
    %1506 = vmatpush1.msra.mxu0 0.0
    %1507 = vmatprep.subr.mxu0 0.0
    %1508 = vmatpush1.msra.mxu0 0.0
    %1509 = vmatprep.subr.mxu0 0.0
    %1510 = vmatpush1.msra.mxu0 0.0
    %1511 = vmatprep.subr.mxu0 0.0
    %1512 = vmatpush1.msra.mxu0 0.0
    %1513 = vmatprep.subr.mxu0 0.0
    %1514 = vmatpush1.msra.mxu0 0.0
    %1515 = vmatprep.subr.mxu0 0.0
    %1516 = vmatpush1.msra.mxu0 0.0
    %1517 = vmatprep.subr.mxu0 0.0
    %1518 = vmatpush1.msra.mxu0 0.0
    %1519 = vmatprep.subr.mxu0 0.0
    %1520 = vmatpush1.msra.mxu0 0.0
    %1521 = vmatprep.subr.mxu0 0.0
    %1522 = vmatpush1.msra.mxu0 0.0
    %1523 = vmatprep.subr.mxu0 0.0
    %1524 = vmatpush1.msra.mxu0 %v1468
    %1525 = vmatprep.subr.mxu0 0.0
    %1526 = vmatpush2.msra.mxu0 0.0
    %1527 = vmatprep.subr.mxu0 0.0
    %1528 = vmatpush2.msra.mxu0 0.0
    %1529 = vmatprep.subr.mxu0 0.0
    %1530 = vmatpush2.msra.mxu0 0.0
    %1531 = vmatprep.subr.mxu0 0.0
    %1532 = vmatpush2.msra.mxu0 0.0
    %1533 = vmatprep.subr.mxu0 0.0
    %1534 = vmatpush2.msra.mxu0 0.0
    %1535 = vmatprep.subr.mxu0 0.0
    %1536 = vmatpush2.msra.mxu0 0.0
    %1537 = vmatprep.subr.mxu0 0.0
    %1538 = vmatpush2.msra.mxu0 0.0
    %1539 = vmatprep.subr.mxu0 0.0
    %1540 = vmatpush2.msra.mxu0 0.0
    %1541 = vmatprep.subr.mxu0 0.0
    %1542 = vmatpush2.msra.mxu0 0.0
    %1543 = vmatprep.subr.mxu0 0.0
    %1544 = vmatpush2.msra.mxu0 0.0
    %1545 = vmatprep.subr.mxu0 0.0
    %1546 = vmatpush2.msra.mxu0 0.0
    %1547 = vmatprep.subr.mxu0 0.0
    %1548 = vmatpush2.msra.mxu0 0.0
    %1549 = vmatprep.subr.mxu0 0.0
    %1550 = vmatpush2.msra.mxu0 0.0
    %1551 = vmatprep.subr.mxu0 0.0
    %1552 = vmatpush2.msra.mxu0 0.0
    %1553 = vmatprep.subr.mxu0 0.0
    %1554 = vmatpush2.msra.mxu0 0.0
    %1555 = vmatprep.subr.mxu0 0.0
    %1556 = vmatpush2.msra.mxu0 0.0
    %1557 = vmatprep.mubr.f32.mxu0 0.0
    %1558 = vmatmul.mubr.f32.gmra.mxu0 %v1470
    %v1559 = vpop.f32.mrf.mxu0
    %v1560 = vadd.f32 0.0, %v1559
    %v1561 = vpop.f32.mrf.mxu0
    %1562 = vmatprep.mubr.f32.mxu0 0.0
    %1563 = vmatmul.mubr.f32.gmra.mxu0 %v1473
    %v1564 = vpop.f32.mrf.mxu0
    %v1565 = vadd.f32 0.0, %v1564
    %v1566 = vpop.f32.mrf.mxu0
    %1567 = vmatprep.mubr.f32.mxu0 0.0
    %1568 = vmatmul.mubr.f32.gmra.mxu0 %v1476
    %v1569 = vpop.f32.mrf.mxu0
    %v1570 = vadd.f32 0.0, %v1569
    %v1571 = vpop.f32.mrf.mxu0
    %1572 = vmatprep.mubr.f32.mxu0 0.0
    %1573 = vmatmul.mubr.f32.gmra.mxu0 %v1479
    %v1574 = vpop.f32.mrf.mxu0
    %v1575 = vadd.f32 0.0, %v1574
    %v1576 = vpop.f32.mrf.mxu0
    %1577 = vmatprep.mubr.f32.mxu0 0.0
    %1578 = vmatmul.mubr.f32.gmra.mxu0 %v1482
    %v1579 = vpop.f32.mrf.mxu0
    %v1580 = vadd.f32 0.0, %v1579
    %v1581 = vpop.f32.mrf.mxu0
    %1582 = vmatprep.mubr.f32.mxu0 0.0
    %1583 = vmatmul.mubr.f32.gmra.mxu0 %v1485
    %v1584 = vpop.f32.mrf.mxu0
    %v1585 = vadd.f32 0.0, %v1584
    %v1586 = vpop.f32.mrf.mxu0
    %1587 = vmatprep.mubr.f32.mxu0 0.0
    %1588 = vmatmul.mubr.f32.gmra.mxu0 %v1488
    %v1589 = vpop.f32.mrf.mxu0
    %v1590 = vadd.f32 0.0, %v1589
    %v1591 = vpop.f32.mrf.mxu0
    %1592 = vmatprep.mubr.f32.mxu0 0.0
    %1593 = vmatmul.mubr.f32.gmra.mxu0 %v1491
    %v1594 = vpop.f32.mrf.mxu0
    %v1595 = vadd.f32 0.0, %v1594
    %v1596 = vpop.f32.mrf.mxu0
    %1597 = vdwg.mxu0
    %1598 = vmax.xlane.f32.xlu0 %v1560
    %v1599 = vpop.xlane.xlu0 %1598
    %1600 = vmax.xlane.f32.xlu0 %v1565
    %v1601 = vpop.xlane.xlu0 %1600
    %1602 = vmax.xlane.f32.xlu0 %v1570
    %v1603 = vpop.xlane.xlu0 %1602
    %1604 = vmax.xlane.f32.xlu0 %v1575
    %v1605 = vpop.xlane.xlu0 %1604
    %1606 = vmax.xlane.f32.xlu0 %v1580
    %v1607 = vpop.xlane.xlu0 %1606
    %1608 = vmax.xlane.f32.xlu0 %v1585
    %v1609 = vpop.xlane.xlu0 %1608
    %1610 = vmax.xlane.f32.xlu0 %v1590
    %v1611 = vpop.xlane.xlu0 %1610
    %1612 = vmax.xlane.f32.xlu0 %v1595
    %v1613 = vpop.xlane.xlu0 %1612
    %v1614 = vsub.f32 %v1560, %v1599
    %v1615 = vsub.f32 %v1565, %v1601
    %v1616 = vsub.f32 %v1570, %v1603
    %v1617 = vsub.f32 %v1575, %v1605
    %v1618 = vsub.f32 %v1580, %v1607
    %v1619 = vsub.f32 %v1585, %v1609
    %v1620 = vsub.f32 %v1590, %v1611
    %v1621 = vsub.f32 %v1595, %v1613
    %v1622 = vmul.f32 %v1614, 1.442695
    %v1623 = vpow.pop %v1622
    %v1624 = vmul.f32 %v1615, 1.442695
    %v1625 = vpow.pop %v1624
    %v1626 = vmul.f32 %v1616, 1.442695
    %v1627 = vpow.pop %v1626
    %v1628 = vmul.f32 %v1617, 1.442695
    %v1629 = vpow.pop %v1628
    %v1630 = vmul.f32 %v1618, 1.442695
    %v1631 = vpow.pop %v1630
    %v1632 = vmul.f32 %v1619, 1.442695
    %v1633 = vpow.pop %v1632
    %v1634 = vmul.f32 %v1620, 1.442695
    %v1635 = vpow.pop %v1634
    %v1636 = vmul.f32 %v1621, 1.442695
    %v1637 = vpow.pop %v1636
    %v1638 = vld [vmem:[%s6] sm:$0xff]
    %v1639 = vld [vmem:[%s6 + $0x8] sm:$0xff]
    %v1640 = vld [vmem:[%s6 + $0x10] sm:$0xff]
    %v1641 = vld [vmem:[%s6 + $0x18] sm:$0xff]
    %v1642 = vld [vmem:[%s6 + $0x20] sm:$0xff]
    %v1643 = vld [vmem:[%s6 + $0x28] sm:$0xff]
    %v1644 = vld [vmem:[%s6 + $0x30] sm:$0xff]
    %v1645 = vld [vmem:[%s6 + $0x38] sm:$0xff]
    %v1646 = vld [vmem:[%s6 + $0x40] sm:$0xff]
    %v1647 = vld [vmem:[%s6 + $0x48] sm:$0xff]
    %v1648 = vld [vmem:[%s6 + $0x50] sm:$0xff]
    %v1649 = vld [vmem:[%s6 + $0x58] sm:$0xff]
    %v1650 = vld [vmem:[%s6 + $0x60] sm:$0xff]
    %v1651 = vld [vmem:[%s6 + $0x68] sm:$0xff]
    %v1652 = vld [vmem:[%s6 + $0x70] sm:$0xff]
    %v1653 = vld [vmem:[%s6 + $0x78] sm:$0xff]
    %1654 = vmatprep.subr.mxu0 0.0
    %1655 = vmatpush1.msra.mxu0 %v1653
    %1656 = vmatprep.subr.mxu0 0.0
    %1657 = vmatpush1.msra.mxu0 %v1652
    %1658 = vmatprep.subr.mxu0 0.0
    %1659 = vmatpush1.msra.mxu0 %v1651
    %1660 = vmatprep.subr.mxu0 0.0
    %1661 = vmatpush1.msra.mxu0 %v1650
    %1662 = vmatprep.subr.mxu0 0.0
    %1663 = vmatpush1.msra.mxu0 %v1649
    %1664 = vmatprep.subr.mxu0 0.0
    %1665 = vmatpush1.msra.mxu0 %v1648
    %1666 = vmatprep.subr.mxu0 0.0
    %1667 = vmatpush1.msra.mxu0 %v1647
    %1668 = vmatprep.subr.mxu0 0.0
    %1669 = vmatpush1.msra.mxu0 %v1646
    %1670 = vmatprep.subr.mxu0 0.0
    %1671 = vmatpush1.msra.mxu0 %v1645
    %1672 = vmatprep.subr.mxu0 0.0
    %1673 = vmatpush1.msra.mxu0 %v1644
    %1674 = vmatprep.subr.mxu0 0.0
    %1675 = vmatpush1.msra.mxu0 %v1643
    %1676 = vmatprep.subr.mxu0 0.0
    %1677 = vmatpush1.msra.mxu0 %v1642
    %1678 = vmatprep.subr.mxu0 0.0
    %1679 = vmatpush1.msra.mxu0 %v1641
    %1680 = vmatprep.subr.mxu0 0.0
    %1681 = vmatpush1.msra.mxu0 %v1640
    %1682 = vmatprep.subr.mxu0 0.0
    %1683 = vmatpush1.msra.mxu0 %v1639
    %1684 = vmatprep.subr.mxu0 0.0
    %1685 = vmatpush1.msra.mxu0 %v1638
    %1686 = vmatprep.subr.mxu0 0.0
    %1687 = vmatpush2.msra.mxu0 0.0
    %1688 = vmatprep.subr.mxu0 0.0
    %1689 = vmatpush2.msra.mxu0 0.0
    %1690 = vmatprep.subr.mxu0 0.0
    %1691 = vmatpush2.msra.mxu0 0.0
    %1692 = vmatprep.subr.mxu0 0.0
    %1693 = vmatpush2.msra.mxu0 0.0
    %1694 = vmatprep.subr.mxu0 0.0
    %1695 = vmatpush2.msra.mxu0 0.0
    %1696 = vmatprep.subr.mxu0 0.0
    %1697 = vmatpush2.msra.mxu0 0.0
    %1698 = vmatprep.subr.mxu0 0.0
    %1699 = vmatpush2.msra.mxu0 0.0
    %1700 = vmatprep.subr.mxu0 0.0
    %1701 = vmatpush2.msra.mxu0 0.0
    %1702 = vmatprep.subr.mxu0 0.0
    %1703 = vmatpush2.msra.mxu0 0.0
    %1704 = vmatprep.subr.mxu0 0.0
    %1705 = vmatpush2.msra.mxu0 0.0
    %1706 = vmatprep.subr.mxu0 0.0
    %1707 = vmatpush2.msra.mxu0 0.0
    %1708 = vmatprep.subr.mxu0 0.0
    %1709 = vmatpush2.msra.mxu0 0.0
    %1710 = vmatprep.subr.mxu0 0.0
    %1711 = vmatpush2.msra.mxu0 0.0
    %1712 = vmatprep.subr.mxu0 0.0
    %1713 = vmatpush2.msra.mxu0 0.0
    %1714 = vmatprep.subr.mxu0 0.0
    %1715 = vmatpush2.msra.mxu0 0.0
    %1716 = vmatprep.subr.mxu0 0.0
    %1717 = vmatpush2.msra.mxu0 0.0
    %1718 = vmatprep.mubr.f32.mxu0 0.0
    %1719 = vmatmul.mubr.f32.gmra.mxu0 %v1623
    %v1720 = vpop.f32.mrf.mxu0
    %v1721 = vadd.f32 0.0, %v1720
    %v1722 = vpop.f32.mrf.mxu0
    %1723 = vmatprep.mubr.f32.mxu0 0.0
    %1724 = vmatmul.mubr.f32.gmra.mxu0 %v1625
    %v1725 = vpop.f32.mrf.mxu0
    %v1726 = vadd.f32 0.0, %v1725
    %v1727 = vpop.f32.mrf.mxu0
    %1728 = vmatprep.mubr.f32.mxu0 0.0
    %1729 = vmatmul.mubr.f32.gmra.mxu0 %v1627
    %v1730 = vpop.f32.mrf.mxu0
    %v1731 = vadd.f32 0.0, %v1730
    %v1732 = vpop.f32.mrf.mxu0
    %1733 = vmatprep.mubr.f32.mxu0 0.0
    %1734 = vmatmul.mubr.f32.gmra.mxu0 %v1629
    %v1735 = vpop.f32.mrf.mxu0
    %v1736 = vadd.f32 0.0, %v1735
    %v1737 = vpop.f32.mrf.mxu0
    %1738 = vmatprep.mubr.f32.mxu0 0.0
    %1739 = vmatmul.mubr.f32.gmra.mxu0 %v1631
    %v1740 = vpop.f32.mrf.mxu0
    %v1741 = vadd.f32 0.0, %v1740
    %v1742 = vpop.f32.mrf.mxu0
    %1743 = vmatprep.mubr.f32.mxu0 0.0
    %1744 = vmatmul.mubr.f32.gmra.mxu0 %v1633
    %v1745 = vpop.f32.mrf.mxu0
    %v1746 = vadd.f32 0.0, %v1745
    %v1747 = vpop.f32.mrf.mxu0
    %1748 = vmatprep.mubr.f32.mxu0 0.0
    %1749 = vmatmul.mubr.f32.gmra.mxu0 %v1635
    %v1750 = vpop.f32.mrf.mxu0
    %v1751 = vadd.f32 0.0, %v1750
    %v1752 = vpop.f32.mrf.mxu0
    %1753 = vmatprep.mubr.f32.mxu0 0.0
    %1754 = vmatmul.mubr.f32.gmra.mxu0 %v1637
    %v1755 = vpop.f32.mrf.mxu0
    %v1756 = vadd.f32 0.0, %v1755
    %v1757 = vpop.f32.mrf.mxu0
    %1758 = vdwg.mxu0
    %v1759 = vrcp.pop %v1721
    %v1760 = vrcp.pop %v1726
    %v1761 = vrcp.pop %v1731
    %v1762 = vrcp.pop %v1736
    %v1763 = vrcp.pop %v1741
    %v1764 = vrcp.pop %v1746
    %v1765 = vrcp.pop %v1751
    %v1766 = vrcp.pop %v1756
    %1775 = vrot.lane.b32.xlu0 %v1759, 120
    %v1776 = vpop.permute.xlu0 %1775
    %1777 = vrot.lane.b32.xlu0 %v1760, 120
    %v1778 = vpop.permute.xlu0 %1777
    %1779 = vrot.lane.b32.xlu0 %v1761, 120
    %v1780 = vpop.permute.xlu0 %1779
    %1781 = vrot.lane.b32.xlu0 %v1762, 120
    %v1782 = vpop.permute.xlu0 %1781
    %1783 = vrot.lane.b32.xlu0 %v1763, 120
    %v1784 = vpop.permute.xlu0 %1783
    %1785 = vrot.lane.b32.xlu0 %v1764, 120
    %v1786 = vpop.permute.xlu0 %1785
    %1787 = vrot.lane.b32.xlu0 %v1765, 120
    %v1788 = vpop.permute.xlu0 %1787
    %1789 = vrot.lane.b32.xlu0 %v1766, 120
    %v1790 = vpop.permute.xlu0 %1789
    %v1799 = vmul.f32 %v1721, %v1776
    %v1800 = vmul.f32 %v1726, %v1778
    %v1801 = vmul.f32 %v1731, %v1780
    %v1802 = vmul.f32 %v1736, %v1782
    %v1803 = vmul.f32 %v1741, %v1784
    %v1804 = vmul.f32 %v1746, %v1786
    %v1805 = vmul.f32 %v1751, %v1788
    %v1806 = vmul.f32 %v1756, %v1790
    %v1807 = vld [vmem:[%s3] sm:$0xff]
    %v1809 = vsel %vm141, %v1807, 0
    %1811 = vmatprep.subr.mxu0 0.0
    %1812 = vmatpush1.msra.mxu0 0.0
    %1813 = vmatprep.subr.mxu0 0.0
    %1814 = vmatpush1.msra.mxu0 0.0
    %1815 = vmatprep.subr.mxu0 0.0
    %1816 = vmatpush1.msra.mxu0 0.0
    %1817 = vmatprep.subr.mxu0 0.0
    %1818 = vmatpush1.msra.mxu0 0.0
    %1819 = vmatprep.subr.mxu0 0.0
    %1820 = vmatpush1.msra.mxu0 0.0
    %1821 = vmatprep.subr.mxu0 0.0
    %1822 = vmatpush1.msra.mxu0 0.0
    %1823 = vmatprep.subr.mxu0 0.0
    %1824 = vmatpush1.msra.mxu0 0.0
    %1825 = vmatprep.subr.mxu0 0.0
    %1826 = vmatpush1.msra.mxu0 0.0
    %1827 = vmatprep.subr.mxu0 0.0
    %1828 = vmatpush1.msra.mxu0 %v1806
    %1829 = vmatprep.subr.mxu0 0.0
    %1830 = vmatpush1.msra.mxu0 %v1805
    %1831 = vmatprep.subr.mxu0 0.0
    %1832 = vmatpush1.msra.mxu0 %v1804
    %1833 = vmatprep.subr.mxu0 0.0
    %1834 = vmatpush1.msra.mxu0 %v1803
    %1835 = vmatprep.subr.mxu0 0.0
    %1836 = vmatpush1.msra.mxu0 %v1802
    %1837 = vmatprep.subr.mxu0 0.0
    %1838 = vmatpush1.msra.mxu0 %v1801
    %1839 = vmatprep.subr.mxu0 0.0
    %1840 = vmatpush1.msra.mxu0 %v1800
    %1841 = vmatprep.subr.mxu0 0.0
    %1842 = vmatpush1.msra.mxu0 %v1799
    %1843 = vmatprep.subr.mxu0 0.0
    %1844 = vmatpush2.msra.mxu0 0.0
    %1845 = vmatprep.subr.mxu0 0.0
    %1846 = vmatpush2.msra.mxu0 0.0
    %1847 = vmatprep.subr.mxu0 0.0
    %1848 = vmatpush2.msra.mxu0 0.0
    %1849 = vmatprep.subr.mxu0 0.0
    %1850 = vmatpush2.msra.mxu0 0.0
    %1851 = vmatprep.subr.mxu0 0.0
    %1852 = vmatpush2.msra.mxu0 0.0
    %1853 = vmatprep.subr.mxu0 0.0
    %1854 = vmatpush2.msra.mxu0 0.0
    %1855 = vmatprep.subr.mxu0 0.0
    %1856 = vmatpush2.msra.mxu0 0.0
    %1857 = vmatprep.subr.mxu0 0.0
    %1858 = vmatpush2.msra.mxu0 0.0
    %1859 = vmatprep.subr.mxu0 0.0
    %1860 = vmatpush2.msra.mxu0 0.0
    %1861 = vmatprep.subr.mxu0 0.0
    %1862 = vmatpush2.msra.mxu0 0.0
    %1863 = vmatprep.subr.mxu0 0.0
    %1864 = vmatpush2.msra.mxu0 0.0
    %1865 = vmatprep.subr.mxu0 0.0
    %1866 = vmatpush2.msra.mxu0 0.0
    %1867 = vmatprep.subr.mxu0 0.0
    %1868 = vmatpush2.msra.mxu0 0.0
    %1869 = vmatprep.subr.mxu0 0.0
    %1870 = vmatpush2.msra.mxu0 0.0
    %1871 = vmatprep.subr.mxu0 0.0
    %1872 = vmatpush2.msra.mxu0 0.0
    %1873 = vmatprep.subr.mxu0 0.0
    %1874 = vmatpush2.msra.mxu0 0.0
    %1875 = vmatprep.mubr.f32.mxu0 0.0
    %1876 = vmatmul.mubr.f32.gmra.mxu0 %v1809
    %v1877 = vpop.f32.mrf.mxu0
    %v1878 = vadd.f32 0.0, %v1877
    %v1879 = vpop.f32.mrf.mxu0
    %1880 = vdwg.mxu0
    %v1881 = vpack.c.bf16 %v1878, %v1878
    %v1882 = vld [vmem:[%s1 + $0x48] sm:$0xf]
    %v1883 = vlaneseq
    %v1884 = vshrl.u32 %v1883, 7
    %v1885 = vsub.s32 0, %v1884
    %v1886 = vrot.slane %v36, %v1885
    %v1888 = vsel %vm205, %v1881, 0
    %v1891 = vsel %vm1399, %v1882, 0
    %1893 = vmatprep.subr.bf16.mxu0 0
    %1894 = vmatpush1.bf16.msra.mxu0 0
    %1895 = vmatprep.subr.bf16.mxu0 0
    %1896 = vmatpush1.bf16.msra.mxu0 0
    %1897 = vmatprep.subr.bf16.mxu0 0
    %1898 = vmatpush1.bf16.msra.mxu0 0
    %1899 = vmatprep.subr.bf16.mxu0 0
    %1900 = vmatpush1.bf16.msra.mxu0 0
    %1901 = vmatprep.subr.bf16.mxu0 0
    %1902 = vmatpush1.bf16.msra.mxu0 0
    %1903 = vmatprep.subr.bf16.mxu0 0
    %1904 = vmatpush1.bf16.msra.mxu0 0
    %1905 = vmatprep.subr.bf16.mxu0 0
    %1906 = vmatpush1.bf16.msra.mxu0 0
    %1907 = vmatprep.subr.bf16.mxu0 0
    %1908 = vmatpush1.bf16.msra.mxu0 %v1891
    %1909 = vmatprep.subr.bf16.mxu0 0
    %1910 = vmatpush2.bf16.msra.mxu0 0
    %1911 = vmatprep.subr.bf16.mxu0 0
    %1912 = vmatpush2.bf16.msra.mxu0 0
    %1913 = vmatprep.subr.bf16.mxu0 0
    %1914 = vmatpush2.bf16.msra.mxu0 0
    %1915 = vmatprep.subr.bf16.mxu0 0
    %1916 = vmatpush2.bf16.msra.mxu0 0
    %1917 = vmatprep.subr.bf16.mxu0 0
    %1918 = vmatpush2.bf16.msra.mxu0 0
    %1919 = vmatprep.subr.bf16.mxu0 0
    %1920 = vmatpush2.bf16.msra.mxu0 0
    %1921 = vmatprep.subr.bf16.mxu0 0
    %1922 = vmatpush2.bf16.msra.mxu0 0
    %1923 = vmatprep.subr.bf16.mxu0 0
    %1924 = vmatpush2.bf16.msra.mxu0 0
    %1925 = vmatprep.mubr.bf16.mxu0 0
    %1926 = vmatmul.mubr.bf16.gmra.mxu0 %v1888
    %v1927 = vpop.f32.mrf.mxu0
    %v1928 = vadd.f32 %v1886, %v1927
    %v1929 = vpop.f32.mrf.mxu0
    %v1930 = vpop.f32.mrf.mxu0
    %v1931 = vpop.f32.mrf.mxu0
    %1932 = vdwg.mxu0
    %1933 = vst.msk [vmem:[#allocation2] sm:$0xff] %vm1198, %v1928
    // Predicated region
    $region30: #{dalle_pallas.1} parent=1 // pred_check
      _
    $region31: #{dalle_pallas.1} parent=1 // pred_check_branch
      %1935 = sbr.rel (0) target = $region33
    $region32: #{dalle_pallas.1} parent=1 // pred_region
      %s1937 = ssub.s32 128, 128
      %1938 = vsyncadd [#allocation3], %s1937
      %s1940 = sshll.u32 [#allocation2], 4
      %s1941 = int_to_ptr.vmem [resolvable:$true] %s1940
      %1943 = dma.vmem_to_hbm [thread:$0]  %s1941, 128, %s7, [#allocation3]
    $region33: #{dalle_pallas.1} parent=1 // pred_fallthru
      _
    // Predicated region
    $region34: #{dalle_pallas.1} parent=1 // pred_check
      _
    $region35: #{dalle_pallas.1} parent=1 // pred_check_branch
      %1945 = sbr.rel (0) target = $region37
    $region36: #{dalle_pallas.1} parent=1 // pred_region
      _
    $region37: #{dalle_pallas.1} parent=1 // pred_fallthru
      _
    // Predicated region
    $region38: #{dalle_pallas.1} parent=1 // pred_check
      _
    $region39: #{dalle_pallas.1} parent=1 // pred_check_branch
      %1947 = sbr.rel (0) target = $region41
    $region40: #{dalle_pallas.1} parent=1 // pred_region
      %1948 = dma.done [#allocation3], 128
    $region41: #{dalle_pallas.1} parent=1 // pred_fallthru
      _
    // Predicated region
    $region42: #{dalle_pallas.1} parent=1 // pred_check
      _
    $region43: #{dalle_pallas.1} parent=1 // pred_check_branch
      %1950 = sbr.rel (0) target = $region45
    $region44: #{dalle_pallas.1} parent=1 // pred_region
      _
    $region45: #{dalle_pallas.1} parent=1 // pred_fallthru
      _
    %1951 = vsyncpa [#allocation3], 1

</llo_original>
